<compile_context>
chip_gen: v5e
topology: v5e:2x2
jax: 0.10.0
libtpu: 0.0.40
codegen_flags: <defaults>
</compile_context>

<pallas_src>
import functools

import jax
import jax.numpy as jnp
import numpy as np
from jax import lax
from jax.experimental import pallas as pl
from jax.experimental.pallas import tpu as pltpu


def _cablock_kernel(xin_ref, xres_ref, m1_ref, m2_ref, w1_ref, w2_ref,
                    wd1_ref, wd2_ref, out_ref, *, b_tile, S, M, Wp, lead, ext):
    # xin_ref  : (1, C, lead + b_tile*S + ext) f32   haloed, lane-grouped input images
    # xres_ref : (1, C, b_tile*S) f32                lane-aligned residual (un-haloed)
    # m1_ref   : (1, b_tile*S + ext) f32             conv2 zero-padding mask (hoisted)
    # m2_ref   : (1, S) f32                          GAP mask with 1/(H*W) folded in
    # w1_ref   : (C, 9C) bf16                        conv1 weights, (kh, kw) row-major taps
    # w2_ref   : (C, 9C) bf16                        conv2 weights
    # wd1_ref  : (C, Cr) f32                         CA squeeze weights (transposed)
    # wd2_ref  : (C, Cr) f32                         CA excite weights
    # out_ref  : (1, C, b_tile*S) f32                padded result (border cropped in wrapper)
    C = out_ref.shape[1]
    W2 = b_tile * S            # conv2 / output / residual lane width (multiple of 128)
    W1 = W2 + ext              # conv1 extended-domain lane width (multiple of 128)

    # Flat tap offsets, (kh, kw) row-major -- must match the wrapper's weight reshape.
    offs = [dy * Wp + dx for dy in (-1, 0, 1) for dx in (-1, 0, 1)]

    xb = xin_ref[0].astype(jnp.bfloat16)                                  # (C, WIN) bf16

    # ---- conv1: one im2col matmul (K = 9C) over the extended flat domain ----
    # TODO(synk): optionally split into 3 accumulating K=3C dots (or pltpu.roll form)
    # to shrink the tap-buffer burst on v5e / exploit the MRB accumulate path on v7x.
    base1 = lead - M
    taps1 = jnp.concatenate(
        [xb[:, base1 + o: base1 + o + W1] for o in offs], axis=0)         # (9C, W1) bf16
    acc1 = jnp.dot(w1_ref[...], taps1,
                   preferred_element_type=jnp.float32)                    # (C, W1) f32
    # ReLU, then zero everything outside the true interior: this *is* conv2's zero
    # padding (mask precomputed in the wrapper, constant across grid steps).
    acc1 = jnp.maximum(acc1, 0.0) * m1_ref[...]
    acc1b = acc1.astype(jnp.bfloat16)

    # ---- conv2: one im2col matmul over the flat padded domain ----
    taps2 = jnp.concatenate(
        [acc1b[:, M + o: M + o + W2] for o in offs], axis=0)              # (9C, W2) bf16
    acc2 = jnp.dot(w2_ref[...], taps2,
                   preferred_element_type=jnp.float32)                    # (C, W2) f32

    # ---- per-image channel attention + residual (128-aligned slices = cheap views) ----
    m2 = m2_ref[...]           # (1, S)
    wd1 = wd1_ref[...]         # (C, Cr)
    wd2 = wd2_ref[...]         # (C, Cr)
    for b in range(b_tile):    # static unroll; b_tile is small
        lo = b * S
        a2 = acc2[:, lo:lo + S]                                           # (C, S)
        gap = jnp.sum(a2 * m2, axis=1, keepdims=True)                     # (C, 1)
        # squeeze/excite as broadcast-multiply + reduce (VPU/XLU), not 1-row MXU dots
        y1 = jnp.maximum(jnp.sum(wd1 * gap, axis=0, keepdims=True), 0.0)  # (1, Cr)
        y2 = jnp.sum(wd2 * y1, axis=1, keepdims=True)                     # (C, 1)
        scale = jax.nn.sigmoid(y2)                                        # (C, 1)
        out_ref[0, :, lo:lo + S] = a2 * scale + xres_ref[0, :, lo:lo + S]


def _ceil_to(x, m):
    return ((x + m - 1) // m) * m


def _build_masks(H, W, b_tile, S, ext):
    """Hoisted interior masks (built once with numpy; constant across grid steps)."""
    Hp, Wp = H + 2, W + 2
    Np = Hp * Wp
    M = Wp + 1
    W2 = b_tile * S
    W1 = W2 + ext

    g = np.arange(W1)
    e = g % S
    p = e - M                                   # padded-grid position of extended index e
    in_tile = g < W2
    in_grid = (p >= 0) & (p < Np)
    i = np.where(in_grid, p // Wp, -1)
    j = np.where(in_grid, p % Wp, -1)
    interior1 = in_tile & in_grid & (i >= 1) & (i <= H) & (j >= 1) & (j <= W)
    mask1 = interior1.astype(np.float32)[None, :]                        # (1, W1)

    q = np.arange(S)
    in_grid2 = q < Np
    i2 = np.where(in_grid2, q // Wp, -1)
    j2 = np.where(in_grid2, q % Wp, -1)
    interior2 = in_grid2 & (i2 >= 1) & (i2 <= H) & (j2 >= 1) & (j2 <= W)
    mask2 = (interior2.astype(np.float32) / float(H * W))[None, :]       # (1, S)
    return jnp.asarray(mask1), jnp.asarray(mask2)


def cablock_pallas(x_nchw, w1, w2, wd1, wd2, b_tile=None):
    """x_nchw: (B, C, H, W) f32. w1/w2: (C, C, 3, 3); wd1: (Cr, C, 1, 1); wd2: (C, Cr, 1, 1)."""
    B, C, H, W = x_nchw.shape
    Cr = wd1.shape[0]
    if b_tile is None:
        # Merge several images per grid step, but keep >=2 steps when possible (v7x megacore).
        b_tile = 1 if B <= 2 else min(4, max(1, B // 2))
    num_tiles = -(-B // b_tile)
    Bp = num_tiles * b_tile

    Hp, Wp = H + 2, W + 2
    Np = Hp * Wp
    M = Wp + 1                       # max |flat tap offset| = Wp + 1
    S = _ceil_to(Np + 2 * M, 128)    # per-image lane slab width (>= Np + 2M, 128-aligned)
    ext = _ceil_to(2 * M, 128)       # halo / extended-domain pad (128-aligned)
    W2 = b_tile * S
    W1 = W2 + ext
    WIN = W2 + 2 * ext
    # Flat-tap-trick prerequisites (ties M, the slab width and the tap order together).
    assert S >= Np + 2 * M and ext >= 2 * M and S % 128 == 0

    x = x_nchw.astype(jnp.float32)
    if Bp != B:
        x = jnp.pad(x, ((0, Bp - B), (0, 0), (0, 0), (0, 0)))
    # Pad spatially, flatten (Hp, Wp) onto the lane axis, pad each image slab to S lanes.
    xslab = jnp.pad(
        jnp.pad(x, ((0, 0), (0, 0), (1, 1), (1, 1))).reshape(Bp, C, Np),
        ((0, 0), (0, 0), (0, S - Np)))                                      # (Bp, C, S)
    # Group b_tile images side-by-side on the lane axis (wrapper-side layout plumbing).
    xres = (xslab.reshape(num_tiles, b_tile, C, S)
                 .transpose(0, 2, 1, 3)
                 .reshape(num_tiles, C, W2))                                # aligned residual
    xin = jnp.pad(xres, ((0, 0), (0, 0), (ext, ext)))                       # (num_tiles, C, WIN)

    # (out, in, kh, kw) -> (out, 9*in), tap order (kh, kw) row-major; bf16 for the MXU.
    w1cat = jnp.transpose(w1, (0, 2, 3, 1)).reshape(C, 9 * C).astype(jnp.bfloat16)
    w2cat = jnp.transpose(w2, (0, 2, 3, 1)).reshape(C, 9 * C).astype(jnp.bfloat16)
    # 1x1 CA convs: (Cr, C, 1, 1) -> (C, Cr); (C, Cr, 1, 1) -> (C, Cr). Kept f32 (VPU path).
    wd1_t = jnp.transpose(wd1[:, :, 0, 0], (1, 0)).astype(jnp.float32)
    wd2_m = wd2[:, :, 0, 0].astype(jnp.float32)

    mask1, mask2 = _build_masks(H, W, b_tile, S, ext)

    kernel = functools.partial(_cablock_kernel, b_tile=b_tile, S=S, M=M, Wp=Wp,
                               lead=ext, ext=ext)
    out = pl.pallas_call(
        kernel,
        out_shape=jax.ShapeDtypeStruct((num_tiles, C, W2), jnp.float32),
        grid_spec=pltpu.PrefetchScalarGridSpec(
            num_scalar_prefetch=0,
            grid=(num_tiles,),
            in_specs=[
                pl.BlockSpec((1, C, WIN), lambda t: (t, 0, 0)),
                pl.BlockSpec((1, C, W2), lambda t: (t, 0, 0)),
                pl.BlockSpec((1, W1), lambda t: (0, 0)),
                pl.BlockSpec((1, S), lambda t: (0, 0)),
                pl.BlockSpec((C, 9 * C), lambda t: (0, 0)),
                pl.BlockSpec((C, 9 * C), lambda t: (0, 0)),
                pl.BlockSpec((C, Cr), lambda t: (0, 0)),
                pl.BlockSpec((C, Cr), lambda t: (0, 0)),
            ],
            out_specs=pl.BlockSpec((1, C, W2), lambda t: (t, 0, 0)),
        ),
        compiler_params=pltpu.CompilerParams(
            dimension_semantics=("parallel",)),
    )(xin, xres, mask1, mask2, w1cat, w2cat, wd1_t, wd2_m)

    # Undo the lane grouping / padding and crop the 1-pixel border (layout only, outside kernel).
    out = (out.reshape(num_tiles, C, b_tile, S)
              .transpose(0, 2, 1, 3)
              .reshape(Bp, C, S)[:, :, :Np]
              .reshape(Bp, C, Hp, Wp)[:B, :, 1:-1, 1:-1])
    return out


def cablock_reference(x, w1, w2, wd1, wd2):
    """Pure-JAX NCHW reference mirroring the PyTorch forward (act = ReLU)."""
    dn = ("NCHW", "OIHW", "NCHW")
    r = lax.conv_general_dilated(x, w1, (1, 1), "SAME", dimension_numbers=dn)
    r = jnp.maximum(r, 0.0)
    r = lax.conv_general_dilated(r, w2, (1, 1), "SAME", dimension_numbers=dn)
    y = jnp.mean(r, axis=(2, 3), keepdims=True)
    y = lax.conv_general_dilated(y, wd1, (1, 1), "VALID", dimension_numbers=dn)
    y = jnp.maximum(y, 0.0)
    y = lax.conv_general_dilated(y, wd2, (1, 1), "VALID", dimension_numbers=dn)
    y = jax.nn.sigmoid(y)
    return r * y + x


if __name__ == "__main__":
    # CABlock(n_feat=16, kernel_size=3, reduction=4, bias=False, act=ReLU)
    B, C, H, W = 4, 16, 16, 16          # B=4 -> b_tile=2, grid=(2,): exercises image batching
    reduction = 4
    Cr = C // reduction

    key = jax.random.PRNGKey(0)
    k = jax.random.split(key, 5)
    x = jax.random.normal(k[0], (B, C, H, W), jnp.float32)
    w1 = 0.1 * jax.random.normal(k[1], (C, C, 3, 3), jnp.float32)      # body conv1
    w2 = 0.1 * jax.random.normal(k[2], (C, C, 3, 3), jnp.float32)      # body conv2
    wd1 = 0.1 * jax.random.normal(k[3], (Cr, C, 1, 1), jnp.float32)    # CA squeeze
    wd2 = 0.1 * jax.random.normal(k[4], (C, Cr, 1, 1), jnp.float32)    # CA excite

    out = jax.block_until_ready(cablock_pallas(x, w1, w2, wd1, wd2))
    ref = jax.block_until_ready(cablock_reference(x, w1, w2, wd1, wd2))
    # bf16 conv taps/weights (f32 accumulation) -> tolerance widened accordingly.
    np.testing.assert_allclose(np.asarray(out), np.asarray(ref), rtol=5e-2, atol=5e-2)
    print("KERNEL_OK")
</pallas_src>

<mosaic_0001>
module attributes {stable_mosaic.version = 11 : i64} {
  func.func @_cablock_kernel(%arg0: i32, %arg1: memref<1x16x1024xf32, #tpu.memory_space<vmem>>, %arg2: memref<1x16x768xf32, #tpu.memory_space<vmem>>, %arg3: memref<1x896xf32, #tpu.memory_space<vmem>>, %arg4: memref<1x384xf32, #tpu.memory_space<vmem>>, %arg5: memref<16x144xbf16, #tpu.memory_space<vmem>>, %arg6: memref<16x144xbf16, #tpu.memory_space<vmem>>, %arg7: memref<16x4xf32, #tpu.memory_space<vmem>>, %arg8: memref<16x4xf32, #tpu.memory_space<vmem>>, %arg9: memref<1x16x768xf32, #tpu.memory_space<vmem>>) attributes {dimension_semantics = [#tpu.dimension_semantics<parallel>], iteration_bounds = array<i64: 2>, scalar_prefetch = 0 : i64, scratch_operands = 0 : i64, tpu.core_type = #tpu.core_type<tc>, window_params = [{transform_indices = @transform_0, window_bounds = array<i64: 1, 16, 1024>}, {transform_indices = @transform_1, window_bounds = array<i64: 1, 16, 768>}, {pipeline_mode = #tpu.pipeline_mode<synchronous>, transform_indices = @transform_2, window_bounds = array<i64: 1, 896>}, {pipeline_mode = #tpu.pipeline_mode<synchronous>, transform_indices = @transform_3, window_bounds = array<i64: 1, 384>}, {pipeline_mode = #tpu.pipeline_mode<synchronous>, transform_indices = @transform_4, window_bounds = array<i64: 16, 144>}, {pipeline_mode = #tpu.pipeline_mode<synchronous>, transform_indices = @transform_5, window_bounds = array<i64: 16, 144>}, {pipeline_mode = #tpu.pipeline_mode<synchronous>, transform_indices = @transform_6, window_bounds = array<i64: 16, 4>}, {pipeline_mode = #tpu.pipeline_mode<synchronous>, transform_indices = @transform_7, window_bounds = array<i64: 16, 4>}, {transform_indices = @transform_8, window_bounds = array<i64: 1, 16, 768>}]} {
    %c0 = arith.constant 0 : index
    %c0_0 = arith.constant 0 : index
    %c0_1 = arith.constant 0 : index
    %0 = vector.load %arg1[%c0, %c0_0, %c0_1] : memref<1x16x1024xf32, #tpu.memory_space<vmem>>, vector<1x16x1024xf32>
    %1 = vector.shape_cast %0 : vector<1x16x1024xf32> to vector<16x1024xf32>
    %2 = arith.truncf %1 : vector<16x1024xf32> to vector<16x1024xbf16>
    %3 = vector.extract_strided_slice %2 {offsets = [0, 90], sizes = [16, 896], strides = [1, 1]} : vector<16x1024xbf16> to vector<16x896xbf16>
    %4 = vector.extract_strided_slice %2 {offsets = [0, 91], sizes = [16, 896], strides = [1, 1]} : vector<16x1024xbf16> to vector<16x896xbf16>
    %5 = vector.extract_strided_slice %2 {offsets = [0, 92], sizes = [16, 896], strides = [1, 1]} : vector<16x1024xbf16> to vector<16x896xbf16>
    %6 = vector.extract_strided_slice %2 {offsets = [0, 108], sizes = [16, 896], strides = [1, 1]} : vector<16x1024xbf16> to vector<16x896xbf16>
    %7 = vector.extract_strided_slice %2 {offsets = [0, 109], sizes = [16, 896], strides = [1, 1]} : vector<16x1024xbf16> to vector<16x896xbf16>
    %8 = vector.extract_strided_slice %2 {offsets = [0, 110], sizes = [16, 896], strides = [1, 1]} : vector<16x1024xbf16> to vector<16x896xbf16>
    %9 = vector.extract_strided_slice %2 {offsets = [0, 126], sizes = [16, 896], strides = [1, 1]} : vector<16x1024xbf16> to vector<16x896xbf16>
    %10 = vector.extract_strided_slice %2 {offsets = [0, 127], sizes = [16, 896], strides = [1, 1]} : vector<16x1024xbf16> to vector<16x896xbf16>
    %11 = vector.extract_strided_slice %2 {offsets = [0, 128], sizes = [16, 896], strides = [1, 1]} : vector<16x1024xbf16> to vector<16x896xbf16>
    %12 = tpu.concatenate %3, %4, %5, %6, %7, %8, %9, %10, %11 in 0 : vector<16x896xbf16>, vector<16x896xbf16>, vector<16x896xbf16>, vector<16x896xbf16>, vector<16x896xbf16>, vector<16x896xbf16>, vector<16x896xbf16>, vector<16x896xbf16>, vector<16x896xbf16> -> vector<144x896xbf16>
    %c0_2 = arith.constant 0 : index
    %c0_3 = arith.constant 0 : index
    %13 = vector.load %arg5[%c0_2, %c0_3] : memref<16x144xbf16, #tpu.memory_space<vmem>>, vector<16x144xbf16>
    %cst = arith.constant dense<0.000000e+00> : vector<16x896xf32>
    %14 = tpu.matmul %13, %12, %cst {dimension_numbers = #tpu.dot_dimension_numbers<[1], [0], [0], [1], [0, 0, 1, 1], [], []>} : vector<16x144xbf16>, vector<144x896xbf16>, vector<16x896xf32> -> vector<16x896xf32>
    %cst_4 = arith.constant 0.000000e+00 : f32
    %15 = vector.broadcast %cst_4 : f32 to vector<16x896xf32>
    %16 = arith.maximumf %14, %15 : vector<16x896xf32>
    %c0_5 = arith.constant 0 : index
    %c0_6 = arith.constant 0 : index
    %17 = vector.load %arg3[%c0_5, %c0_6] : memref<1x896xf32, #tpu.memory_space<vmem>>, vector<1x896xf32>
    %18 = vector.broadcast %17 : vector<1x896xf32> to vector<16x896xf32>
    %19 = arith.mulf %16, %18 : vector<16x896xf32>
    %20 = arith.truncf %19 : vector<16x896xf32> to vector<16x896xbf16>
    %21 = vector.extract_strided_slice %20 {offsets = [0, 0], sizes = [16, 768], strides = [1, 1]} : vector<16x896xbf16> to vector<16x768xbf16>
    %22 = vector.extract_strided_slice %20 {offsets = [0, 1], sizes = [16, 768], strides = [1, 1]} : vector<16x896xbf16> to vector<16x768xbf16>
    %23 = vector.extract_strided_slice %20 {offsets = [0, 2], sizes = [16, 768], strides = [1, 1]} : vector<16x896xbf16> to vector<16x768xbf16>
    %24 = vector.extract_strided_slice %20 {offsets = [0, 18], sizes = [16, 768], strides = [1, 1]} : vector<16x896xbf16> to vector<16x768xbf16>
    %25 = vector.extract_strided_slice %20 {offsets = [0, 19], sizes = [16, 768], strides = [1, 1]} : vector<16x896xbf16> to vector<16x768xbf16>
    %26 = vector.extract_strided_slice %20 {offsets = [0, 20], sizes = [16, 768], strides = [1, 1]} : vector<16x896xbf16> to vector<16x768xbf16>
    %27 = vector.extract_strided_slice %20 {offsets = [0, 36], sizes = [16, 768], strides = [1, 1]} : vector<16x896xbf16> to vector<16x768xbf16>
    %28 = vector.extract_strided_slice %20 {offsets = [0, 37], sizes = [16, 768], strides = [1, 1]} : vector<16x896xbf16> to vector<16x768xbf16>
    %29 = vector.extract_strided_slice %20 {offsets = [0, 38], sizes = [16, 768], strides = [1, 1]} : vector<16x896xbf16> to vector<16x768xbf16>
    %30 = tpu.concatenate %21, %22, %23, %24, %25, %26, %27, %28, %29 in 0 : vector<16x768xbf16>, vector<16x768xbf16>, vector<16x768xbf16>, vector<16x768xbf16>, vector<16x768xbf16>, vector<16x768xbf16>, vector<16x768xbf16>, vector<16x768xbf16>, vector<16x768xbf16> -> vector<144x768xbf16>
    %c0_7 = arith.constant 0 : index
    %c0_8 = arith.constant 0 : index
    %31 = vector.load %arg6[%c0_7, %c0_8] : memref<16x144xbf16, #tpu.memory_space<vmem>>, vector<16x144xbf16>
    %cst_9 = arith.constant dense<0.000000e+00> : vector<16x768xf32>
    %32 = tpu.matmul %31, %30, %cst_9 {dimension_numbers = #tpu.dot_dimension_numbers<[1], [0], [0], [1], [0, 0, 1, 1], [], []>} : vector<16x144xbf16>, vector<144x768xbf16>, vector<16x768xf32> -> vector<16x768xf32>
    %c0_10 = arith.constant 0 : index
    %c0_11 = arith.constant 0 : index
    %33 = vector.load %arg4[%c0_10, %c0_11] : memref<1x384xf32, #tpu.memory_space<vmem>>, vector<1x384xf32>
    %c0_12 = arith.constant 0 : index
    %c0_13 = arith.constant 0 : index
    %34 = vector.load %arg7[%c0_12, %c0_13] : memref<16x4xf32, #tpu.memory_space<vmem>>, vector<16x4xf32>
    %c0_14 = arith.constant 0 : index
    %c0_15 = arith.constant 0 : index
    %35 = vector.load %arg8[%c0_14, %c0_15] : memref<16x4xf32, #tpu.memory_space<vmem>>, vector<16x4xf32>
    %36 = vector.extract_strided_slice %32 {offsets = [0, 0], sizes = [16, 384], strides = [1, 1]} : vector<16x768xf32> to vector<16x384xf32>
    %37 = vector.broadcast %33 : vector<1x384xf32> to vector<16x384xf32>
    %38 = arith.mulf %36, %37 : vector<16x384xf32>
    %cst_16 = arith.constant dense<0.000000e+00> : vector<16xf32>
    %39 = vector.multi_reduction <add>, %38, %cst_16 [1] : vector<16x384xf32> to vector<16xf32>
    %40 = vector.shape_cast %39 : vector<16xf32> to vector<16x1xf32>
    %41 = vector.broadcast %40 : vector<16x1xf32> to vector<16x4xf32>
    %42 = arith.mulf %34, %41 : vector<16x4xf32>
    %cst_17 = arith.constant dense<0.000000e+00> : vector<4xf32>
    %43 = vector.multi_reduction <add>, %42, %cst_17 [0] : vector<16x4xf32> to vector<4xf32>
    %44 = vector.shape_cast %43 : vector<4xf32> to vector<1x4xf32>
    %cst_18 = arith.constant 0.000000e+00 : f32
    %45 = vector.broadcast %cst_18 : f32 to vector<1x4xf32>
    %46 = arith.maximumf %44, %45 : vector<1x4xf32>
    %47 = vector.broadcast %46 : vector<1x4xf32> to vector<16x4xf32>
    %48 = arith.mulf %35, %47 : vector<16x4xf32>
    %cst_19 = arith.constant dense<0.000000e+00> : vector<16xf32>
    %49 = vector.multi_reduction <add>, %48, %cst_19 [1] : vector<16x4xf32> to vector<16xf32>
    %50 = vector.shape_cast %49 : vector<16xf32> to vector<16x1xf32>
    %51 = arith.negf %50 : vector<16x1xf32>
    %52 = math.exp %51 : vector<16x1xf32>
    %cst_20 = arith.constant 1.000000e+00 : f32
    %53 = vector.broadcast %cst_20 : f32 to vector<16x1xf32>
    %54 = arith.addf %53, %52 : vector<16x1xf32>
    %55 = arith.divf %53, %54 : vector<16x1xf32>
    %56 = vector.broadcast %55 : vector<16x1xf32> to vector<16x384xf32>
    %57 = arith.mulf %36, %56 : vector<16x384xf32>
    %c0_21 = arith.constant 0 : index
    %c0_22 = arith.constant 0 : index
    %c0_23 = arith.constant 0 : index
    %58 = vector.load %arg2[%c0_21, %c0_22, %c0_23] : memref<1x16x768xf32, #tpu.memory_space<vmem>>, vector<1x16x384xf32>
    %59 = vector.shape_cast %58 : vector<1x16x384xf32> to vector<16x384xf32>
    %60 = arith.addf %57, %59 : vector<16x384xf32>
    %c0_24 = arith.constant 0 : index
    %c0_25 = arith.constant 0 : index
    %c0_26 = arith.constant 0 : index
    %61 = vector.load %arg9[%c0_24, %c0_25, %c0_26] : memref<1x16x768xf32, #tpu.memory_space<vmem>>, vector<1x16x384xf32>
    %62 = vector.shape_cast %61 : vector<1x16x384xf32> to vector<16x384xf32>
    %63 = vector.shape_cast %60 : vector<16x384xf32> to vector<1x16x384xf32>
    tpu.vector_store %arg9[%c0_24, %c0_25, %c0_26], %63 {strides = array<i32>} : memref<1x16x768xf32, #tpu.memory_space<vmem>>, vector<1x16x384xf32>,
    %64 = vector.extract_strided_slice %32 {offsets = [0, 384], sizes = [16, 384], strides = [1, 1]} : vector<16x768xf32> to vector<16x384xf32>
    %65 = vector.broadcast %33 : vector<1x384xf32> to vector<16x384xf32>
    %66 = arith.mulf %64, %65 : vector<16x384xf32>
    %cst_27 = arith.constant dense<0.000000e+00> : vector<16xf32>
    %67 = vector.multi_reduction <add>, %66, %cst_27 [1] : vector<16x384xf32> to vector<16xf32>
    %68 = vector.shape_cast %67 : vector<16xf32> to vector<16x1xf32>
    %69 = vector.broadcast %68 : vector<16x1xf32> to vector<16x4xf32>
    %70 = arith.mulf %34, %69 : vector<16x4xf32>
    %cst_28 = arith.constant dense<0.000000e+00> : vector<4xf32>
    %71 = vector.multi_reduction <add>, %70, %cst_28 [0] : vector<16x4xf32> to vector<4xf32>
    %72 = vector.shape_cast %71 : vector<4xf32> to vector<1x4xf32>
    %cst_29 = arith.constant 0.000000e+00 : f32
    %73 = vector.broadcast %cst_29 : f32 to vector<1x4xf32>
    %74 = arith.maximumf %72, %73 : vector<1x4xf32>
    %75 = vector.broadcast %74 : vector<1x4xf32> to vector<16x4xf32>
    %76 = arith.mulf %35, %75 : vector<16x4xf32>
    %cst_30 = arith.constant dense<0.000000e+00> : vector<16xf32>
    %77 = vector.multi_reduction <add>, %76, %cst_30 [1] : vector<16x4xf32> to vector<16xf32>
    %78 = vector.shape_cast %77 : vector<16xf32> to vector<16x1xf32>
    %79 = arith.negf %78 : vector<16x1xf32>
    %80 = math.exp %79 : vector<16x1xf32>
    %cst_31 = arith.constant 1.000000e+00 : f32
    %81 = vector.broadcast %cst_31 : f32 to vector<16x1xf32>
    %82 = arith.addf %81, %80 : vector<16x1xf32>
    %83 = arith.divf %81, %82 : vector<16x1xf32>
    %84 = vector.broadcast %83 : vector<16x1xf32> to vector<16x384xf32>
    %85 = arith.mulf %64, %84 : vector<16x384xf32>
    %c0_32 = arith.constant 0 : index
    %c0_33 = arith.constant 0 : index
    %c384 = arith.constant 384 : index
    %86 = vector.load %arg2[%c0_32, %c0_33, %c384] : memref<1x16x768xf32, #tpu.memory_space<vmem>>, vector<1x16x384xf32>
    %87 = vector.shape_cast %86 : vector<1x16x384xf32> to vector<16x384xf32>
    %88 = arith.addf %85, %87 : vector<16x384xf32>
    %c0_34 = arith.constant 0 : index
    %c0_35 = arith.constant 0 : index
    %c384_36 = arith.constant 384 : index
    %89 = vector.load %arg9[%c0_34, %c0_35, %c384_36] : memref<1x16x768xf32, #tpu.memory_space<vmem>>, vector<1x16x384xf32>
    %90 = vector.shape_cast %89 : vector<1x16x384xf32> to vector<16x384xf32>
    %91 = vector.shape_cast %88 : vector<16x384xf32> to vector<1x16x384xf32>
    tpu.vector_store %arg9[%c0_34, %c0_35, %c384_36], %91 {strides = array<i32>} : memref<1x16x768xf32, #tpu.memory_space<vmem>>, vector<1x16x384xf32>,
    return
  }
  func.func @transform_0(%arg0: i32) -> (i32, i32, i32) {
    %c0_i32 = arith.constant 0 : i32
    %c0_i32_0 = arith.constant 0 : i32
    %c0_i32_1 = arith.constant 0 : i32
    return %arg0, %c0_i32, %c0_i32_0 : i32, i32, i32
  }
  func.func @transform_1(%arg0: i32) -> (i32, i32, i32) {
    %c0_i32 = arith.constant 0 : i32
    %c0_i32_0 = arith.constant 0 : i32
    %c0_i32_1 = arith.constant 0 : i32
    return %arg0, %c0_i32, %c0_i32_0 : i32, i32, i32
  }
  func.func @transform_2(%arg0: i32) -> (i32, i32) {
    %c0_i32 = arith.constant 0 : i32
    %c0_i32_0 = arith.constant 0 : i32
    %c0_i32_1 = arith.constant 0 : i32
    return %c0_i32, %c0_i32_0 : i32, i32
  }
  func.func @transform_3(%arg0: i32) -> (i32, i32) {
    %c0_i32 = arith.constant 0 : i32
    %c0_i32_0 = arith.constant 0 : i32
    %c0_i32_1 = arith.constant 0 : i32
    return %c0_i32, %c0_i32_0 : i32, i32
  }
  func.func @transform_4(%arg0: i32) -> (i32, i32) {
    %c0_i32 = arith.constant 0 : i32
    %c0_i32_0 = arith.constant 0 : i32
    %c0_i32_1 = arith.constant 0 : i32
    return %c0_i32, %c0_i32_0 : i32, i32
  }
  func.func @transform_5(%arg0: i32) -> (i32, i32) {
    %c0_i32 = arith.constant 0 : i32
    %c0_i32_0 = arith.constant 0 : i32
    %c0_i32_1 = arith.constant 0 : i32
    return %c0_i32, %c0_i32_0 : i32, i32
  }
  func.func @transform_6(%arg0: i32) -> (i32, i32) {
    %c0_i32 = arith.constant 0 : i32
    %c0_i32_0 = arith.constant 0 : i32
    %c0_i32_1 = arith.constant 0 : i32
    return %c0_i32, %c0_i32_0 : i32, i32
  }
  func.func @transform_7(%arg0: i32) -> (i32, i32) {
    %c0_i32 = arith.constant 0 : i32
    %c0_i32_0 = arith.constant 0 : i32
    %c0_i32_1 = arith.constant 0 : i32
    return %c0_i32, %c0_i32_0 : i32, i32
  }
  func.func @transform_8(%arg0: i32) -> (i32, i32, i32) {
    %c0_i32 = arith.constant 0 : i32
    %c0_i32_0 = arith.constant 0 : i32
    %c0_i32_1 = arith.constant 0 : i32
    return %arg0, %c0_i32, %c0_i32_0 : i32, i32, i32
  }
}

</mosaic_0001>

<llo_original>
// kernel: tpu_custom_call.1
$region0: #{tpu_custom_call.1}
  #allocation0 [shape = 'u32[]', space=smem, size = 0x4, offset = 0x4, fixed_abs, tag = 'smem constant byte address 0x4 - core index']
  #allocation1 [shape = 'u32[72,128]{1,0:T(1,128)}', space=vmem, size = 0x9000, scoped, tag = 'internal scratch']
  %s0 = inlined_call_operand.hbm [shape: f32[2,16,1024], index: 0, kind: input, shape index: {}]
  %s1 = inlined_call_operand.hbm [shape: f32[2,16,768], index: 1, kind: input, shape index: {}]
  %s2 = inlined_call_operand.hbm [shape: f32[1,896], index: 2, kind: input, shape index: {}]
  %s3 = inlined_call_operand.vmem [shape: f32[1,384], index: 3, kind: input, shape index: {}]
  %s4 = inlined_call_operand.vmem [shape: bf16[16,144], index: 4, kind: input, shape index: {}]
  %s5 = inlined_call_operand.vmem [shape: bf16[16,144], index: 5, kind: input, shape index: {}]
  %s6 = inlined_call_operand.vmem [shape: f32[16,4], index: 6, kind: input, shape index: {}]
  %s7 = inlined_call_operand.vmem [shape: f32[16,4], index: 7, kind: input, shape index: {}]
  %s8 = inlined_call_operand.hbm [shape: f32[2,16,768], index: 8, kind: output, shape index: {}]
  %s9 = sld [smem:[#allocation0]]
  $region77: #{tpu_custom_call.1} parent=0
    _
  %s11 = ssub.s32 1, %s9
  %s12 = scalar_select 0, %s11, %s9
  $region1: #{tpu_custom_call.1} parent=0
    #allocation2 [shape = 'u8[131072]{0}', space=vmem, size = 0x20000, scoped, tag = 'input window, operand 0']
    #allocation3 [shape = 's32[2]{0}', space=sflag, size = 0x8, scoped, tag = 'scoped memory for tpu_custom_call.1']
    #allocation4 [shape = 's32[2]{0}', space=sflag, size = 0x8, scoped, tag = 'scoped memory for tpu_custom_call.1']
    #allocation5 [shape = 'u8[98304]{0}', space=vmem, size = 0x18000, scoped, tag = 'input window, operand 1']
    #allocation6 [shape = 's32[2]{0}', space=sflag, size = 0x8, scoped, tag = 'scoped memory for tpu_custom_call.1']
    #allocation7 [shape = 'u8[3584]{0}', space=vmem, size = 0x1000, scoped, tag = 'input window, operand 2, single buffered']
    #allocation8 [shape = 'u8[98304]{0}', space=vmem, size = 0x18000, scoped, tag = 'output window, operand 0']
    %13 = vsyncpa [#allocation3], 0
    %s14 = scalar_lea.sflag [#allocation3], 1
    %15 = vsyncpa %s14, 0
    %16 = vsyncpa [#allocation6], 0
    %s17 = scalar_lea.sflag [#allocation6], 1
    %18 = vsyncpa %s17, 0
    %19 = vsyncpa [#allocation4], 0
    %s20 = scalar_lea.sflag [#allocation4], 1
    %21 = vsyncpa %s20, 0
    loop: start=0, step=1, limit=4
    $region2: #{tpu_custom_call.1} parent=1 // loop_pre_header
      _
    $region3: #{tpu_custom_call.1} parent=1 // loop_header
      %s23 = sphi 0, %s27
      %p24 = scmp.ge.s32.totalorder %s23, 4
      %s33 = sphi 0, %s35
      %s36 = sphi 0, %s33
      %s37 = sphi 0, %s36
      %s53 = sphi 0, %s37
      %s59 = sphi 0, %s61
      %s62 = sphi 0, %s59
      %s63 = sphi 0, %s62
      %s79 = sphi 0, %s63
      %s83 = sphi 0, %s83
      %s85 = sphi 0, %s83
      %s86 = sphi 0, %s85
      %s100 = sphi 0, %s86
      %s104 = sphi 0, %s104
      %s106 = sphi 0, %s104
      %s107 = sphi 0, %s106
      %s121 = sphi 0, %s107
      %s125 = sphi 0, %s125
      %s127 = sphi 0, %s125
      %s128 = sphi 0, %s127
      %s142 = sphi 0, %s128
      %s146 = sphi 0, %s146
      %s148 = sphi 0, %s146
      %s149 = sphi 0, %s148
      %s163 = sphi 0, %s149
      %s167 = sphi 0, %s167
      %s169 = sphi 0, %s167
      %s170 = sphi 0, %s169
      %s184 = sphi 0, %s170
      %s188 = sphi 0, %s188
      %s190 = sphi 0, %s188
      %s191 = sphi 0, %s190
      %s205 = sphi 0, %s191
      %s211 = sphi 0, %s213
      %s214 = sphi 0, %s211
      %s215 = sphi 0, %s214
      %s231 = sphi 0, %s215
    $region4: #{tpu_custom_call.1} parent=1 // loop_header_branch
      %26 = sbr.rel (%p24) target = $region8
    $region5: #{tpu_custom_call.1} parent=1 // loop_body
      %s28 = ssub.s32 %s23, 1
      %s29 = ssub.s32 %s23, 2
      %s30 = sadd.s32 %s23, 1
      %s31 = ssub.s32 %s23, %s30
      %p32 = scmp.eq.s32.totalorder %s31, 0
      %s34 = sadd.s32 %s33, 1
      %s35 = scalar_select %p32, %s33, %s34
      %p38 = pneg %p32
      %p39 = scmp.eq.s32.totalorder %s23, 1
      %p40 = por %p38, %p39
      %p41 = scmp.ne.s32.totalorder %s33, %s36
      %p42 = scmp.eq.s32.totalorder %s23, 0
      %p43 = por %p41, %p42
      %p44 = scmp.ne.s32.totalorder %s33, %s36
      %p45 = scmp.eq.s32.totalorder %s28, 1
      %p46 = por %p44, %p45
      %p47 = scmp.ne.s32.totalorder %s36, %s37
      %p48 = scmp.eq.s32.totalorder %s28, 0
      %p49 = por %p47, %p48
      %p50 = scmp.ne.s32.totalorder %s36, %s37
      %p51 = scmp.eq.s32.totalorder %s29, 1
      %p52 = por %p50, %p51
      %p54 = scmp.ne.s32.totalorder %s37, %s53
      %p55 = scmp.eq.s32.totalorder %s29, 0
      %p56 = por %p54, %p55
      %s57 = ssub.s32 %s23, %s30
      %p58 = scmp.eq.s32.totalorder %s57, 0
      %s60 = sadd.s32 %s59, 1
      %s61 = scalar_select %p58, %s59, %s60
      %p64 = pneg %p58
      %p65 = scmp.eq.s32.totalorder %s23, 1
      %p66 = por %p64, %p65
      %p67 = scmp.ne.s32.totalorder %s59, %s62
      %p68 = scmp.eq.s32.totalorder %s23, 0
      %p69 = por %p67, %p68
      %p70 = scmp.ne.s32.totalorder %s59, %s62
      %p71 = scmp.eq.s32.totalorder %s28, 1
      %p72 = por %p70, %p71
      %p73 = scmp.ne.s32.totalorder %s62, %s63
      %p74 = scmp.eq.s32.totalorder %s28, 0
      %p75 = por %p73, %p74
      %p76 = scmp.ne.s32.totalorder %s62, %s63
      %p77 = scmp.eq.s32.totalorder %s29, 1
      %p78 = por %p76, %p77
      %p80 = scmp.ne.s32.totalorder %s63, %s79
      %p81 = scmp.eq.s32.totalorder %s29, 0
      %p82 = por %p80, %p81
      %s84 = sadd.s32 %s83, 1
      %p87 = scmp.eq.s32.totalorder %s23, 1
      %p88 = scmp.ne.s32.totalorder %s83, %s85
      %p89 = scmp.eq.s32.totalorder %s23, 0
      %p90 = por %p88, %p89
      %p91 = scmp.ne.s32.totalorder %s83, %s85
      %p92 = scmp.eq.s32.totalorder %s28, 1
      %p93 = por %p91, %p92
      %p94 = scmp.ne.s32.totalorder %s85, %s86
      %p95 = scmp.eq.s32.totalorder %s28, 0
      %p96 = por %p94, %p95
      %p97 = scmp.ne.s32.totalorder %s85, %s86
      %p98 = scmp.eq.s32.totalorder %s29, 1
      %p99 = por %p97, %p98
      %p101 = scmp.ne.s32.totalorder %s86, %s100
      %p102 = scmp.eq.s32.totalorder %s29, 0
      %p103 = por %p101, %p102
      %s105 = sadd.s32 %s104, 1
      %p108 = scmp.eq.s32.totalorder %s23, 1
      %p109 = scmp.ne.s32.totalorder %s104, %s106
      %p110 = scmp.eq.s32.totalorder %s23, 0
      %p111 = por %p109, %p110
      %p112 = scmp.ne.s32.totalorder %s104, %s106
      %p113 = scmp.eq.s32.totalorder %s28, 1
      %p114 = por %p112, %p113
      %p115 = scmp.ne.s32.totalorder %s106, %s107
      %p116 = scmp.eq.s32.totalorder %s28, 0
      %p117 = por %p115, %p116
      %p118 = scmp.ne.s32.totalorder %s106, %s107
      %p119 = scmp.eq.s32.totalorder %s29, 1
      %p120 = por %p118, %p119
      %p122 = scmp.ne.s32.totalorder %s107, %s121
      %p123 = scmp.eq.s32.totalorder %s29, 0
      %p124 = por %p122, %p123
      %s126 = sadd.s32 %s125, 1
      %p129 = scmp.eq.s32.totalorder %s23, 1
      %p130 = scmp.ne.s32.totalorder %s125, %s127
      %p131 = scmp.eq.s32.totalorder %s23, 0
      %p132 = por %p130, %p131
      %p133 = scmp.ne.s32.totalorder %s125, %s127
      %p134 = scmp.eq.s32.totalorder %s28, 1
      %p135 = por %p133, %p134
      %p136 = scmp.ne.s32.totalorder %s127, %s128
      %p137 = scmp.eq.s32.totalorder %s28, 0
      %p138 = por %p136, %p137
      %p139 = scmp.ne.s32.totalorder %s127, %s128
      %p140 = scmp.eq.s32.totalorder %s29, 1
      %p141 = por %p139, %p140
      %p143 = scmp.ne.s32.totalorder %s128, %s142
      %p144 = scmp.eq.s32.totalorder %s29, 0
      %p145 = por %p143, %p144
      %s147 = sadd.s32 %s146, 1
      %p150 = scmp.eq.s32.totalorder %s23, 1
      %p151 = scmp.ne.s32.totalorder %s146, %s148
      %p152 = scmp.eq.s32.totalorder %s23, 0
      %p153 = por %p151, %p152
      %p154 = scmp.ne.s32.totalorder %s146, %s148
      %p155 = scmp.eq.s32.totalorder %s28, 1
      %p156 = por %p154, %p155
      %p157 = scmp.ne.s32.totalorder %s148, %s149
      %p158 = scmp.eq.s32.totalorder %s28, 0
      %p159 = por %p157, %p158
      %p160 = scmp.ne.s32.totalorder %s148, %s149
      %p161 = scmp.eq.s32.totalorder %s29, 1
      %p162 = por %p160, %p161
      %p164 = scmp.ne.s32.totalorder %s149, %s163
      %p165 = scmp.eq.s32.totalorder %s29, 0
      %p166 = por %p164, %p165
      %s168 = sadd.s32 %s167, 1
      %p171 = scmp.eq.s32.totalorder %s23, 1
      %p172 = scmp.ne.s32.totalorder %s167, %s169
      %p173 = scmp.eq.s32.totalorder %s23, 0
      %p174 = por %p172, %p173
      %p175 = scmp.ne.s32.totalorder %s167, %s169
      %p176 = scmp.eq.s32.totalorder %s28, 1
      %p177 = por %p175, %p176
      %p178 = scmp.ne.s32.totalorder %s169, %s170
      %p179 = scmp.eq.s32.totalorder %s28, 0
      %p180 = por %p178, %p179
      %p181 = scmp.ne.s32.totalorder %s169, %s170
      %p182 = scmp.eq.s32.totalorder %s29, 1
      %p183 = por %p181, %p182
      %p185 = scmp.ne.s32.totalorder %s170, %s184
      %p186 = scmp.eq.s32.totalorder %s29, 0
      %p187 = por %p185, %p186
      %s189 = sadd.s32 %s188, 1
      %p192 = scmp.eq.s32.totalorder %s23, 1
      %p193 = scmp.ne.s32.totalorder %s188, %s190
      %p194 = scmp.eq.s32.totalorder %s23, 0
      %p195 = por %p193, %p194
      %p196 = scmp.ne.s32.totalorder %s188, %s190
      %p197 = scmp.eq.s32.totalorder %s28, 1
      %p198 = por %p196, %p197
      %p199 = scmp.ne.s32.totalorder %s190, %s191
      %p200 = scmp.eq.s32.totalorder %s28, 0
      %p201 = por %p199, %p200
      %p202 = scmp.ne.s32.totalorder %s190, %s191
      %p203 = scmp.eq.s32.totalorder %s29, 1
      %p204 = por %p202, %p203
      %p206 = scmp.ne.s32.totalorder %s191, %s205
      %p207 = scmp.eq.s32.totalorder %s29, 0
      %p208 = por %p206, %p207
      %s209 = ssub.s32 %s23, %s30
      %p210 = scmp.eq.s32.totalorder %s209, 0
      %s212 = sadd.s32 %s211, 1
      %s213 = scalar_select %p210, %s211, %s212
      %p216 = pneg %p210
      %p217 = scmp.eq.s32.totalorder %s23, 1
      %p218 = por %p216, %p217
      %p219 = scmp.ne.s32.totalorder %s211, %s214
      %p220 = scmp.eq.s32.totalorder %s23, 0
      %p221 = por %p219, %p220
      %p222 = scmp.ne.s32.totalorder %s211, %s214
      %p223 = scmp.eq.s32.totalorder %s28, 1
      %p224 = por %p222, %p223
      %p225 = scmp.ne.s32.totalorder %s214, %s215
      %p226 = scmp.eq.s32.totalorder %s28, 0
      %p227 = por %p225, %p226
      %p228 = scmp.ne.s32.totalorder %s214, %s215
      %p229 = scmp.eq.s32.totalorder %s29, 1
      %p230 = por %p228, %p229
      %p232 = scmp.ne.s32.totalorder %s215, %s231
      %p233 = scmp.eq.s32.totalorder %s29, 0
      %p234 = por %p232, %p233
      %p235 = scmp.le.s32.totalorder 1, %s23
      %p236 = scmp.lt.s32.totalorder %s23, 3
      %p237 = pnand %p235, %p236
      %p238 = pneg %p237
      // Predicated region
      $region9: #{tpu_custom_call.1} parent=5 // pred_check
        _
      $region10: #{tpu_custom_call.1} parent=5 // pred_check_branch
        %240 = sbr.rel (%p237) target = $region12
      $region11: #{tpu_custom_call.1} parent=5 // pred_region
        %s241 = ssub.s32 %s23, 1
        // Predicated region
        $region13: #{tpu_custom_call.1} parent=11 // pred_check
          %p242 = pneg %p96
        $region14: #{tpu_custom_call.1} parent=11 // pred_check_branch
          %244 = sbr.rel (%p242) target = $region16
        $region15: #{tpu_custom_call.1} parent=11 // pred_region
          %246 = vsyncadd [#allocation6], 0
          %s248 = sshll.u32 %s2, 4
          %s249 = int_to_ptr.hbm [resolvable:$true] %s248
          %s250 = sshll.u32 [#allocation7], 4
          %s251 = int_to_ptr.vmem [resolvable:$true] %s250
          %253 = dma.hbm_to_vmem [thread:$0]  %s249, 112, %s251, [#allocation6]
        $region16: #{tpu_custom_call.1} parent=11 // pred_fallthru
          _
        // Predicated region
        $region17: #{tpu_custom_call.1} parent=11 // pred_check
          %p254 = pneg %p117
        $region18: #{tpu_custom_call.1} parent=11 // pred_check_branch
          %256 = sbr.rel (%p254) target = $region20
        $region19: #{tpu_custom_call.1} parent=11 // pred_region
          _
        $region20: #{tpu_custom_call.1} parent=11 // pred_fallthru
          _
        // Predicated region
        $region21: #{tpu_custom_call.1} parent=11 // pred_check
          %p257 = pneg %p138
        $region22: #{tpu_custom_call.1} parent=11 // pred_check_branch
          %259 = sbr.rel (%p257) target = $region24
        $region23: #{tpu_custom_call.1} parent=11 // pred_region
          _
        $region24: #{tpu_custom_call.1} parent=11 // pred_fallthru
          _
        // Predicated region
        $region25: #{tpu_custom_call.1} parent=11 // pred_check
          %p260 = pneg %p159
        $region26: #{tpu_custom_call.1} parent=11 // pred_check_branch
          %262 = sbr.rel (%p260) target = $region28
        $region27: #{tpu_custom_call.1} parent=11 // pred_region
          _
        $region28: #{tpu_custom_call.1} parent=11 // pred_fallthru
          _
        // Predicated region
        $region29: #{tpu_custom_call.1} parent=11 // pred_check
          %p263 = pneg %p180
        $region30: #{tpu_custom_call.1} parent=11 // pred_check_branch
          %265 = sbr.rel (%p263) target = $region32
        $region31: #{tpu_custom_call.1} parent=11 // pred_region
          _
        $region32: #{tpu_custom_call.1} parent=11 // pred_fallthru
          _
        // Predicated region
        $region33: #{tpu_custom_call.1} parent=11 // pred_check
          %p266 = pneg %p201
        $region34: #{tpu_custom_call.1} parent=11 // pred_check_branch
          %268 = sbr.rel (%p266) target = $region36
        $region35: #{tpu_custom_call.1} parent=11 // pred_region
          _
        $region36: #{tpu_custom_call.1} parent=11 // pred_fallthru
          _
      $region12: #{tpu_custom_call.1} parent=5 // pred_fallthru
        _
      %p269 = scmp.lt.s32.totalorder %s23, 2
      // Predicated region
      $region37: #{tpu_custom_call.1} parent=5 // pred_check
        %p270 = pneg %p269
      $region38: #{tpu_custom_call.1} parent=5 // pred_check_branch
        %272 = sbr.rel (%p270) target = $region40
      $region39: #{tpu_custom_call.1} parent=5 // pred_region
        // Predicated region
        $region41: #{tpu_custom_call.1} parent=39 // pred_check
          %p273 = pneg %p43
        $region42: #{tpu_custom_call.1} parent=39 // pred_check_branch
          %275 = sbr.rel (%p273) target = $region44
        $region43: #{tpu_custom_call.1} parent=39 // pred_region
          %s276 = sand.u32 %s33, 1
          %s277 = scalar_lea.sflag [#allocation3], %s276
          %s278 = sand.u32 %s33, 1
          %s279 = smul.addr %s278, 128
          %s280 = scalar_lea.vmem [#allocation2], %s279
          %282 = vsyncadd %s277, 0
          %s283 = smul.addr %s23, 16
          %s284 = smul.addr %s283, 8
          %s285 = scalar_lea.hbm %s0, %s284
          %s286 = sshll.u32 %s285, 4
          %s287 = int_to_ptr.hbm [resolvable:$true] %s286
          %s288 = sshll.u32 %s280, 4
          %s289 = int_to_ptr.vmem [resolvable:$true] %s288
          %294 = dma.hbm_to_vmem [thread:$0]  %s287, 2048, %s289, %s277, 1024, 1024, 64
        $region44: #{tpu_custom_call.1} parent=39 // pred_fallthru
          _
        // Predicated region
        $region45: #{tpu_custom_call.1} parent=39 // pred_check
          %p295 = pneg %p69
        $region46: #{tpu_custom_call.1} parent=39 // pred_check_branch
          %297 = sbr.rel (%p295) target = $region48
        $region47: #{tpu_custom_call.1} parent=39 // pred_region
          %s298 = sand.u32 %s23, 1
          %s299 = scalar_lea.sflag [#allocation6], %s298
          %s300 = sand.u32 %s59, 1
          %s301 = smul.addr %s300, 96
          %s302 = scalar_lea.vmem [#allocation5], %s301
          %304 = vsyncadd %s299, 0
          %s305 = smul.addr %s23, 12
          %s306 = smul.addr %s305, 8
          %s307 = scalar_lea.hbm %s1, %s306
          %s308 = sshll.u32 %s307, 4
          %s309 = int_to_ptr.hbm [resolvable:$true] %s308
          %s310 = sshll.u32 %s302, 4
          %s311 = int_to_ptr.vmem [resolvable:$true] %s310
          %316 = dma.hbm_to_vmem [thread:$0]  %s309, 1536, %s311, %s299, 768, 768, 48
        $region48: #{tpu_custom_call.1} parent=39 // pred_fallthru
          _
      $region40: #{tpu_custom_call.1} parent=5 // pred_fallthru
        _
      %p317 = scmp.le.s32.totalorder 1, %s23
      %p318 = scmp.lt.s32.totalorder %s23, 3
      %p319 = pnand %p317, %p318
      %p320 = pneg %p319
      // Predicated region
      $region49: #{tpu_custom_call.1} parent=5 // pred_check
        _
      $region50: #{tpu_custom_call.1} parent=5 // pred_check_branch
        %322 = sbr.rel (%p319) target = $region52
      $region51: #{tpu_custom_call.1} parent=5 // pred_region
        %s323 = ssub.s32 %s23, 1
        %s324 = sand.u32 %s36, 1
        %s325 = scalar_lea.sflag [#allocation3], %s324
        %s326 = sand.u32 %s36, 1
        %s327 = smul.addr %s326, 128
        %s328 = scalar_lea.vmem [#allocation2], %s327
        // Predicated region
        $region53: #{tpu_custom_call.1} parent=51 // pred_check
          %p329 = pneg %p49
        $region54: #{tpu_custom_call.1} parent=51 // pred_check_branch
          %331 = sbr.rel (%p329) target = $region56
        $region55: #{tpu_custom_call.1} parent=51 // pred_region
          %333 = dma.done %s325, 2048
        $region56: #{tpu_custom_call.1} parent=51 // pred_fallthru
          _
        %s334 = sand.u32 %s28, 1
        %s335 = scalar_lea.sflag [#allocation6], %s334
        %s336 = sand.u32 %s62, 1
        %s337 = smul.addr %s336, 96
        %s338 = scalar_lea.vmem [#allocation5], %s337
        // Predicated region
        $region57: #{tpu_custom_call.1} parent=51 // pred_check
          %p339 = pneg %p75
        $region58: #{tpu_custom_call.1} parent=51 // pred_check_branch
          %341 = sbr.rel (%p339) target = $region60
        $region59: #{tpu_custom_call.1} parent=51 // pred_region
          %343 = dma.done %s335, 1536
        $region60: #{tpu_custom_call.1} parent=51 // pred_fallthru
          _
        // Predicated region
        $region61: #{tpu_custom_call.1} parent=51 // pred_check
          %p344 = pneg %p96
        $region62: #{tpu_custom_call.1} parent=51 // pred_check_branch
          %346 = sbr.rel (%p344) target = $region64
        $region63: #{tpu_custom_call.1} parent=51 // pred_region
          %348 = dma.done [#allocation6], 112
        $region64: #{tpu_custom_call.1} parent=51 // pred_fallthru
          _
        %s349 = sand.u32 %s36, 1
        %s350 = scalar_lea.sflag [#allocation3], %s349
        %s351 = sand.u32 %s36, 1
        %s352 = smul.addr %s351, 128
        %s353 = scalar_lea.vmem [#allocation2], %s352
        %p354 = pneg %p49
        %p355 = pneg %p46
        %s356 = sand.u32 %s28, 1
        %s357 = scalar_lea.sflag [#allocation6], %s356
        %s358 = sand.u32 %s62, 1
        %s359 = smul.addr %s358, 96
        %s360 = scalar_lea.vmem [#allocation5], %s359
        %p361 = pneg %p75
        %p362 = pneg %p72
        %p363 = pneg %p96
        %p364 = pneg %p93
        %p365 = pneg %p117
        %p366 = pneg %p114
        %p367 = pneg %p138
        %p368 = pneg %p135
        %p369 = pneg %p159
        %p370 = pneg %p156
        %p371 = pneg %p180
        %p372 = pneg %p177
        %p373 = pneg %p201
        %p374 = pneg %p198
        %p375 = pneg %p227
        %p376 = pneg %p224
        %s377 = sand.u32 %s214, 1
        %s378 = scalar_lea.sflag [#allocation4], %s377
        %s379 = sand.u32 %s214, 1
        %s380 = smul.addr %s379, 96
        %s381 = scalar_lea.vmem [#allocation8], %s380
        %v383 = vld [vmem:[%s328] sm:$0xff]
        %v384 = vld [vmem:[%s328 + $0x8] sm:$0xff]
        %v385 = vld [vmem:[%s328 + $0x10] sm:$0xff]
        %v386 = vld [vmem:[%s328 + $0x18] sm:$0xff]
        %v387 = vld [vmem:[%s328 + $0x20] sm:$0xff]
        %v388 = vld [vmem:[%s328 + $0x28] sm:$0xff]
        %v389 = vld [vmem:[%s328 + $0x30] sm:$0xff]
        %v390 = vld [vmem:[%s328 + $0x38] sm:$0xff]
        %v391 = vld [vmem:[%s328 + $0x40] sm:$0xff]
        %v392 = vld [vmem:[%s328 + $0x48] sm:$0xff]
        %v393 = vld [vmem:[%s328 + $0x50] sm:$0xff]
        %v394 = vld [vmem:[%s328 + $0x58] sm:$0xff]
        %v395 = vld [vmem:[%s328 + $0x60] sm:$0xff]
        %v396 = vld [vmem:[%s328 + $0x68] sm:$0xff]
        %v397 = vld [vmem:[%s328 + $0x70] sm:$0xff]
        %v398 = vld [vmem:[%s328 + $0x78] sm:$0xff]
        %v399 = vpack.c.bf16 %v384, %v383
        %v400 = vpack.c.bf16 %v386, %v385
        %v401 = vpack.c.bf16 %v388, %v387
        %v402 = vpack.c.bf16 %v390, %v389
        %v403 = vpack.c.bf16 %v392, %v391
        %v404 = vpack.c.bf16 %v394, %v393
        %v405 = vpack.c.bf16 %v396, %v395
        %v406 = vpack.c.bf16 %v398, %v397
        %v415 = vunpack.c.l.b16 %v399
        %v416 = vunpack.c.h.b16 %v399
        %v417 = vunpack.c.l.b16 %v400
        %v418 = vunpack.c.h.b16 %v400
        %v419 = vunpack.c.l.b16 %v401
        %v420 = vunpack.c.h.b16 %v401
        %v421 = vunpack.c.l.b16 %v402
        %v422 = vunpack.c.h.b16 %v402
        %v423 = vunpack.c.l.b16 %v403
        %v424 = vunpack.c.h.b16 %v403
        %v425 = vunpack.c.l.b16 %v404
        %v426 = vunpack.c.h.b16 %v404
        %v427 = vunpack.c.l.b16 %v405
        %v428 = vunpack.c.h.b16 %v405
        %v429 = vunpack.c.l.b16 %v406
        %v430 = vunpack.c.h.b16 %v406
        %v431 = vpack.c.b16 %v423, %v415
        %v432 = vpack.c.b16 %v424, %v416
        %v433 = vpack.c.b16 %v425, %v417
        %v434 = vpack.c.b16 %v426, %v418
        %v435 = vpack.c.b16 %v427, %v419
        %v436 = vpack.c.b16 %v428, %v420
        %v437 = vpack.c.b16 %v429, %v421
        %v438 = vpack.c.b16 %v430, %v422
        %439 = vrot.lane.b32.xlu0 %v431, 127
        %v440 = vpop.permute.xlu0 %439
        %441 = vrot.lane.b32.xlu0 %v432, 127
        %v442 = vpop.permute.xlu0 %441
        %443 = vrot.lane.b32.xlu0 %v433, 127
        %v444 = vpop.permute.xlu0 %443
        %445 = vrot.lane.b32.xlu0 %v434, 127
        %v446 = vpop.permute.xlu0 %445
        %447 = vrot.lane.b32.xlu0 %v435, 127
        %v448 = vpop.permute.xlu0 %447
        %449 = vrot.lane.b32.xlu0 %v436, 127
        %v450 = vpop.permute.xlu0 %449
        %451 = vrot.lane.b32.xlu0 %v437, 127
        %v452 = vpop.permute.xlu0 %451
        %453 = vrot.lane.b32.xlu0 %v438, 127
        %v454 = vpop.permute.xlu0 %453
        %vm455 = vcmask 1039360
        %v456 = vsel %vm455, %v440, %v442
        %v457 = vsel %vm455, %v442, %v444
        %v458 = vsel %vm455, %v444, %v446
        %v459 = vsel %vm455, %v446, %v448
        %v460 = vsel %vm455, %v448, %v450
        %v461 = vsel %vm455, %v450, %v452
        %v462 = vsel %vm455, %v452, %v454
        %463 = vrot.lane.b32.xlu0 %v431, 126
        %v464 = vpop.permute.xlu0 %463
        %465 = vrot.lane.b32.xlu0 %v432, 126
        %v466 = vpop.permute.xlu0 %465
        %467 = vrot.lane.b32.xlu0 %v433, 126
        %v468 = vpop.permute.xlu0 %467
        %469 = vrot.lane.b32.xlu0 %v434, 126
        %v470 = vpop.permute.xlu0 %469
        %471 = vrot.lane.b32.xlu0 %v435, 126
        %v472 = vpop.permute.xlu0 %471
        %473 = vrot.lane.b32.xlu0 %v436, 126
        %v474 = vpop.permute.xlu0 %473
        %475 = vrot.lane.b32.xlu0 %v437, 126
        %v476 = vpop.permute.xlu0 %475
        %477 = vrot.lane.b32.xlu0 %v438, 126
        %v478 = vpop.permute.xlu0 %477
        %vm479 = vcmask 1031168
        %v480 = vsel %vm479, %v464, %v466
        %v481 = vsel %vm479, %v466, %v468
        %v482 = vsel %vm479, %v468, %v470
        %v483 = vsel %vm479, %v470, %v472
        %v484 = vsel %vm479, %v472, %v474
        %v485 = vsel %vm479, %v474, %v476
        %v486 = vsel %vm479, %v476, %v478
        %487 = vrot.lane.b32.xlu0 %v431, 110
        %v488 = vpop.permute.xlu0 %487
        %489 = vrot.lane.b32.xlu0 %v432, 110
        %v490 = vpop.permute.xlu0 %489
        %491 = vrot.lane.b32.xlu0 %v433, 110
        %v492 = vpop.permute.xlu0 %491
        %493 = vrot.lane.b32.xlu0 %v434, 110
        %v494 = vpop.permute.xlu0 %493
        %495 = vrot.lane.b32.xlu0 %v435, 110
        %v496 = vpop.permute.xlu0 %495
        %497 = vrot.lane.b32.xlu0 %v436, 110
        %v498 = vpop.permute.xlu0 %497
        %499 = vrot.lane.b32.xlu0 %v437, 110
        %v500 = vpop.permute.xlu0 %499
        %501 = vrot.lane.b32.xlu0 %v438, 110
        %v502 = vpop.permute.xlu0 %501
        %vm503 = vcmask 900096
        %v504 = vsel %vm503, %v488, %v490
        %v505 = vsel %vm503, %v490, %v492
        %v506 = vsel %vm503, %v492, %v494
        %v507 = vsel %vm503, %v494, %v496
        %v508 = vsel %vm503, %v496, %v498
        %v509 = vsel %vm503, %v498, %v500
        %v510 = vsel %vm503, %v500, %v502
        %511 = vrot.lane.b32.xlu0 %v431, 109
        %v512 = vpop.permute.xlu0 %511
        %513 = vrot.lane.b32.xlu0 %v432, 109
        %v514 = vpop.permute.xlu0 %513
        %515 = vrot.lane.b32.xlu0 %v433, 109
        %v516 = vpop.permute.xlu0 %515
        %517 = vrot.lane.b32.xlu0 %v434, 109
        %v518 = vpop.permute.xlu0 %517
        %519 = vrot.lane.b32.xlu0 %v435, 109
        %v520 = vpop.permute.xlu0 %519
        %521 = vrot.lane.b32.xlu0 %v436, 109
        %v522 = vpop.permute.xlu0 %521
        %523 = vrot.lane.b32.xlu0 %v437, 109
        %v524 = vpop.permute.xlu0 %523
        %525 = vrot.lane.b32.xlu0 %v438, 109
        %v526 = vpop.permute.xlu0 %525
        %vm527 = vcmask 891904
        %v528 = vsel %vm527, %v512, %v514
        %v529 = vsel %vm527, %v514, %v516
        %v530 = vsel %vm527, %v516, %v518
        %v531 = vsel %vm527, %v518, %v520
        %v532 = vsel %vm527, %v520, %v522
        %v533 = vsel %vm527, %v522, %v524
        %v534 = vsel %vm527, %v524, %v526
        %535 = vrot.lane.b32.xlu0 %v431, 108
        %v536 = vpop.permute.xlu0 %535
        %537 = vrot.lane.b32.xlu0 %v432, 108
        %v538 = vpop.permute.xlu0 %537
        %539 = vrot.lane.b32.xlu0 %v433, 108
        %v540 = vpop.permute.xlu0 %539
        %541 = vrot.lane.b32.xlu0 %v434, 108
        %v542 = vpop.permute.xlu0 %541
        %543 = vrot.lane.b32.xlu0 %v435, 108
        %v544 = vpop.permute.xlu0 %543
        %545 = vrot.lane.b32.xlu0 %v436, 108
        %v546 = vpop.permute.xlu0 %545
        %547 = vrot.lane.b32.xlu0 %v437, 108
        %v548 = vpop.permute.xlu0 %547
        %549 = vrot.lane.b32.xlu0 %v438, 108
        %v550 = vpop.permute.xlu0 %549
        %vm551 = vcmask 883712
        %v552 = vsel %vm551, %v536, %v538
        %v553 = vsel %vm551, %v538, %v540
        %v554 = vsel %vm551, %v540, %v542
        %v555 = vsel %vm551, %v542, %v544
        %v556 = vsel %vm551, %v544, %v546
        %v557 = vsel %vm551, %v546, %v548
        %v558 = vsel %vm551, %v548, %v550
        %559 = vrot.lane.b32.xlu0 %v431, 92
        %v560 = vpop.permute.xlu0 %559
        %561 = vrot.lane.b32.xlu0 %v432, 92
        %v562 = vpop.permute.xlu0 %561
        %563 = vrot.lane.b32.xlu0 %v433, 92
        %v564 = vpop.permute.xlu0 %563
        %565 = vrot.lane.b32.xlu0 %v434, 92
        %v566 = vpop.permute.xlu0 %565
        %567 = vrot.lane.b32.xlu0 %v435, 92
        %v568 = vpop.permute.xlu0 %567
        %569 = vrot.lane.b32.xlu0 %v436, 92
        %v570 = vpop.permute.xlu0 %569
        %571 = vrot.lane.b32.xlu0 %v437, 92
        %v572 = vpop.permute.xlu0 %571
        %573 = vrot.lane.b32.xlu0 %v438, 92
        %v574 = vpop.permute.xlu0 %573
        %vm575 = vcmask 752640
        %v576 = vsel %vm575, %v560, %v562
        %v577 = vsel %vm575, %v562, %v564
        %v578 = vsel %vm575, %v564, %v566
        %v579 = vsel %vm575, %v566, %v568
        %v580 = vsel %vm575, %v568, %v570
        %v581 = vsel %vm575, %v570, %v572
        %v582 = vsel %vm575, %v572, %v574
        %583 = vrot.lane.b32.xlu0 %v431, 91
        %v584 = vpop.permute.xlu0 %583
        %585 = vrot.lane.b32.xlu0 %v432, 91
        %v586 = vpop.permute.xlu0 %585
        %587 = vrot.lane.b32.xlu0 %v433, 91
        %v588 = vpop.permute.xlu0 %587
        %589 = vrot.lane.b32.xlu0 %v434, 91
        %v590 = vpop.permute.xlu0 %589
        %591 = vrot.lane.b32.xlu0 %v435, 91
        %v592 = vpop.permute.xlu0 %591
        %593 = vrot.lane.b32.xlu0 %v436, 91
        %v594 = vpop.permute.xlu0 %593
        %595 = vrot.lane.b32.xlu0 %v437, 91
        %v596 = vpop.permute.xlu0 %595
        %597 = vrot.lane.b32.xlu0 %v438, 91
        %v598 = vpop.permute.xlu0 %597
        %vm599 = vcmask 744448
        %v600 = vsel %vm599, %v584, %v586
        %v601 = vsel %vm599, %v586, %v588
        %v602 = vsel %vm599, %v588, %v590
        %v603 = vsel %vm599, %v590, %v592
        %v604 = vsel %vm599, %v592, %v594
        %v605 = vsel %vm599, %v594, %v596
        %v606 = vsel %vm599, %v596, %v598
        %607 = vrot.lane.b32.xlu0 %v432, 90
        %v608 = vpop.permute.xlu0 %607
        %609 = vrot.lane.b32.xlu0 %v433, 90
        %v610 = vpop.permute.xlu0 %609
        %611 = vrot.lane.b32.xlu0 %v434, 90
        %v612 = vpop.permute.xlu0 %611
        %613 = vrot.lane.b32.xlu0 %v435, 90
        %v614 = vpop.permute.xlu0 %613
        %615 = vrot.lane.b32.xlu0 %v436, 90
        %v616 = vpop.permute.xlu0 %615
        %617 = vrot.lane.b32.xlu0 %v437, 90
        %v618 = vpop.permute.xlu0 %617
        %619 = vrot.lane.b32.xlu0 %v438, 90
        %v620 = vpop.permute.xlu0 %619
        %vm621 = vcmask 736256
        %v622 = vsel %vm621, %v608, %v610
        %v623 = vsel %vm621, %v610, %v612
        %v624 = vsel %vm621, %v612, %v614
        %v625 = vsel %vm621, %v614, %v616
        %v626 = vsel %vm621, %v616, %v618
        %v627 = vsel %vm621, %v618, %v620
        %v628 = vld [vmem:[%s4] sm:$0xff]
        %v629 = vld [vmem:[%s4 + $0x8] sm:$0xff]
        %v632 = vunpack.c.l.b16 %v628
        %v633 = vunpack.c.h.b16 %v628
        %v634 = vunpack.c.l.b16 %v629
        %v635 = vunpack.c.h.b16 %v629
        %v636 = vpack.c.b16 %v634, %v632
        %v637 = vpack.c.b16 %v635, %v633
        %639 = vrot.lane.b32.xlu0 %v431, 38
        %v640 = vpop.permute.xlu0 %639
        %641 = vrot.lane.b32.xlu0 %v432, 38
        %v642 = vpop.permute.xlu0 %641
        %643 = vrot.lane.b32.xlu0 %v433, 38
        %v644 = vpop.permute.xlu0 %643
        %645 = vrot.lane.b32.xlu0 %v434, 38
        %v646 = vpop.permute.xlu0 %645
        %647 = vrot.lane.b32.xlu0 %v435, 38
        %v648 = vpop.permute.xlu0 %647
        %649 = vrot.lane.b32.xlu0 %v436, 38
        %v650 = vpop.permute.xlu0 %649
        %651 = vrot.lane.b32.xlu0 %v437, 38
        %v652 = vpop.permute.xlu0 %651
        %653 = vrot.lane.b32.xlu0 %v438, 38
        %v654 = vpop.permute.xlu0 %653
        %655 = vrot.lane.b32.xlu0 %v456, 38
        %v656 = vpop.permute.xlu0 %655
        %657 = vrot.lane.b32.xlu0 %v457, 38
        %v658 = vpop.permute.xlu0 %657
        %659 = vrot.lane.b32.xlu0 %v458, 38
        %v660 = vpop.permute.xlu0 %659
        %661 = vrot.lane.b32.xlu0 %v459, 38
        %v662 = vpop.permute.xlu0 %661
        %663 = vrot.lane.b32.xlu0 %v460, 38
        %v664 = vpop.permute.xlu0 %663
        %665 = vrot.lane.b32.xlu0 %v461, 38
        %v666 = vpop.permute.xlu0 %665
        %667 = vrot.lane.b32.xlu0 %v462, 38
        %v668 = vpop.permute.xlu0 %667
        %669 = vrot.lane.b32.xlu0 %v454, 38
        %v670 = vpop.permute.xlu0 %669
        %671 = vrot.lane.b32.xlu0 %v480, 38
        %v672 = vpop.permute.xlu0 %671
        %673 = vrot.lane.b32.xlu0 %v481, 38
        %v674 = vpop.permute.xlu0 %673
        %675 = vrot.lane.b32.xlu0 %v482, 38
        %v676 = vpop.permute.xlu0 %675
        %677 = vrot.lane.b32.xlu0 %v483, 38
        %v678 = vpop.permute.xlu0 %677
        %679 = vrot.lane.b32.xlu0 %v484, 38
        %v680 = vpop.permute.xlu0 %679
        %681 = vrot.lane.b32.xlu0 %v485, 38
        %v682 = vpop.permute.xlu0 %681
        %683 = vrot.lane.b32.xlu0 %v486, 38
        %v684 = vpop.permute.xlu0 %683
        %685 = vrot.lane.b32.xlu0 %v478, 38
        %v686 = vpop.permute.xlu0 %685
        %687 = vrot.lane.b32.xlu0 %v504, 38
        %v688 = vpop.permute.xlu0 %687
        %689 = vrot.lane.b32.xlu0 %v505, 38
        %v690 = vpop.permute.xlu0 %689
        %691 = vrot.lane.b32.xlu0 %v506, 38
        %v692 = vpop.permute.xlu0 %691
        %693 = vrot.lane.b32.xlu0 %v507, 38
        %v694 = vpop.permute.xlu0 %693
        %695 = vrot.lane.b32.xlu0 %v508, 38
        %v696 = vpop.permute.xlu0 %695
        %697 = vrot.lane.b32.xlu0 %v509, 38
        %v698 = vpop.permute.xlu0 %697
        %699 = vrot.lane.b32.xlu0 %v510, 38
        %v700 = vpop.permute.xlu0 %699
        %701 = vrot.lane.b32.xlu0 %v502, 38
        %v702 = vpop.permute.xlu0 %701
        %703 = vrot.lane.b32.xlu0 %v528, 38
        %v704 = vpop.permute.xlu0 %703
        %705 = vrot.lane.b32.xlu0 %v529, 38
        %v706 = vpop.permute.xlu0 %705
        %707 = vrot.lane.b32.xlu0 %v530, 38
        %v708 = vpop.permute.xlu0 %707
        %709 = vrot.lane.b32.xlu0 %v531, 38
        %v710 = vpop.permute.xlu0 %709
        %711 = vrot.lane.b32.xlu0 %v532, 38
        %v712 = vpop.permute.xlu0 %711
        %713 = vrot.lane.b32.xlu0 %v533, 38
        %v714 = vpop.permute.xlu0 %713
        %715 = vrot.lane.b32.xlu0 %v534, 38
        %v716 = vpop.permute.xlu0 %715
        %717 = vrot.lane.b32.xlu0 %v526, 38
        %v718 = vpop.permute.xlu0 %717
        %719 = vrot.lane.b32.xlu0 %v552, 38
        %v720 = vpop.permute.xlu0 %719
        %721 = vrot.lane.b32.xlu0 %v553, 38
        %v722 = vpop.permute.xlu0 %721
        %723 = vrot.lane.b32.xlu0 %v554, 38
        %v724 = vpop.permute.xlu0 %723
        %725 = vrot.lane.b32.xlu0 %v555, 38
        %v726 = vpop.permute.xlu0 %725
        %727 = vrot.lane.b32.xlu0 %v556, 38
        %v728 = vpop.permute.xlu0 %727
        %729 = vrot.lane.b32.xlu0 %v557, 38
        %v730 = vpop.permute.xlu0 %729
        %731 = vrot.lane.b32.xlu0 %v558, 38
        %v732 = vpop.permute.xlu0 %731
        %733 = vrot.lane.b32.xlu0 %v550, 38
        %v734 = vpop.permute.xlu0 %733
        %735 = vrot.lane.b32.xlu0 %v576, 38
        %v736 = vpop.permute.xlu0 %735
        %737 = vrot.lane.b32.xlu0 %v577, 38
        %v738 = vpop.permute.xlu0 %737
        %739 = vrot.lane.b32.xlu0 %v578, 38
        %v740 = vpop.permute.xlu0 %739
        %741 = vrot.lane.b32.xlu0 %v579, 38
        %v742 = vpop.permute.xlu0 %741
        %743 = vrot.lane.b32.xlu0 %v580, 38
        %v744 = vpop.permute.xlu0 %743
        %745 = vrot.lane.b32.xlu0 %v581, 38
        %v746 = vpop.permute.xlu0 %745
        %747 = vrot.lane.b32.xlu0 %v582, 38
        %v748 = vpop.permute.xlu0 %747
        %749 = vrot.lane.b32.xlu0 %v574, 38
        %v750 = vpop.permute.xlu0 %749
        %751 = vrot.lane.b32.xlu0 %v600, 38
        %v752 = vpop.permute.xlu0 %751
        %753 = vrot.lane.b32.xlu0 %v601, 38
        %v754 = vpop.permute.xlu0 %753
        %755 = vrot.lane.b32.xlu0 %v602, 38
        %v756 = vpop.permute.xlu0 %755
        %757 = vrot.lane.b32.xlu0 %v603, 38
        %v758 = vpop.permute.xlu0 %757
        %759 = vrot.lane.b32.xlu0 %v604, 38
        %v760 = vpop.permute.xlu0 %759
        %761 = vrot.lane.b32.xlu0 %v605, 38
        %v762 = vpop.permute.xlu0 %761
        %763 = vrot.lane.b32.xlu0 %v606, 38
        %v764 = vpop.permute.xlu0 %763
        %765 = vrot.lane.b32.xlu0 %v598, 38
        %v766 = vpop.permute.xlu0 %765
        %767 = vrot.lane.b32.xlu0 %v608, 38
        %v768 = vpop.permute.xlu0 %767
        %769 = vrot.lane.b32.xlu0 %v622, 38
        %v770 = vpop.permute.xlu0 %769
        %771 = vrot.lane.b32.xlu0 %v623, 38
        %v772 = vpop.permute.xlu0 %771
        %773 = vrot.lane.b32.xlu0 %v624, 38
        %v774 = vpop.permute.xlu0 %773
        %775 = vrot.lane.b32.xlu0 %v625, 38
        %v776 = vpop.permute.xlu0 %775
        %777 = vrot.lane.b32.xlu0 %v626, 38
        %v778 = vpop.permute.xlu0 %777
        %779 = vrot.lane.b32.xlu0 %v627, 38
        %v780 = vpop.permute.xlu0 %779
        %781 = vrot.lane.b32.xlu0 %v620, 38
        %v782 = vpop.permute.xlu0 %781
        %vm783 = vcmask 310272
        %v784 = vsel %vm783, %v640, %v642
        %v785 = vsel %vm783, %v642, %v644
        %v786 = vsel %vm783, %v644, %v646
        %v787 = vsel %vm783, %v646, %v648
        %v788 = vsel %vm783, %v648, %v650
        %v789 = vsel %vm783, %v650, %v652
        %v790 = vsel %vm783, %v652, %v654
        %v791 = vsel %vm783, %v656, %v658
        %v792 = vsel %vm783, %v658, %v660
        %v793 = vsel %vm783, %v660, %v662
        %v794 = vsel %vm783, %v662, %v664
        %v795 = vsel %vm783, %v664, %v666
        %v796 = vsel %vm783, %v666, %v668
        %v797 = vsel %vm783, %v668, %v670
        %v798 = vsel %vm783, %v672, %v674
        %v799 = vsel %vm783, %v674, %v676
        %v800 = vsel %vm783, %v676, %v678
        %v801 = vsel %vm783, %v678, %v680
        %v802 = vsel %vm783, %v680, %v682
        %v803 = vsel %vm783, %v682, %v684
        %v804 = vsel %vm783, %v684, %v686
        %v805 = vsel %vm783, %v688, %v690
        %v806 = vsel %vm783, %v690, %v692
        %v807 = vsel %vm783, %v692, %v694
        %v808 = vsel %vm783, %v694, %v696
        %v809 = vsel %vm783, %v696, %v698
        %v810 = vsel %vm783, %v698, %v700
        %v811 = vsel %vm783, %v700, %v702
        %v812 = vsel %vm783, %v704, %v706
        %v813 = vsel %vm783, %v706, %v708
        %v814 = vsel %vm783, %v708, %v710
        %v815 = vsel %vm783, %v710, %v712
        %v816 = vsel %vm783, %v712, %v714
        %v817 = vsel %vm783, %v714, %v716
        %v818 = vsel %vm783, %v716, %v718
        %v819 = vsel %vm783, %v720, %v722
        %v820 = vsel %vm783, %v722, %v724
        %v821 = vsel %vm783, %v724, %v726
        %v822 = vsel %vm783, %v726, %v728
        %v823 = vsel %vm783, %v728, %v730
        %v824 = vsel %vm783, %v730, %v732
        %v825 = vsel %vm783, %v732, %v734
        %v826 = vsel %vm783, %v736, %v738
        %v827 = vsel %vm783, %v738, %v740
        %v828 = vsel %vm783, %v740, %v742
        %v829 = vsel %vm783, %v742, %v744
        %v830 = vsel %vm783, %v744, %v746
        %v831 = vsel %vm783, %v746, %v748
        %v832 = vsel %vm783, %v748, %v750
        %v833 = vsel %vm783, %v752, %v754
        %v834 = vsel %vm783, %v754, %v756
        %v835 = vsel %vm783, %v756, %v758
        %v836 = vsel %vm783, %v758, %v760
        %v837 = vsel %vm783, %v760, %v762
        %v838 = vsel %vm783, %v762, %v764
        %v839 = vsel %vm783, %v764, %v766
        %v840 = vsel %vm783, %v768, %v770
        %v841 = vsel %vm783, %v770, %v772
        %v842 = vsel %vm783, %v772, %v774
        %v843 = vsel %vm783, %v774, %v776
        %v844 = vsel %vm783, %v776, %v778
        %v845 = vsel %vm783, %v778, %v780
        %v846 = vsel %vm783, %v780, %v782
        %vm910 = vcmask 130048
        %v912 = vsel %vm910, %v637, 0
        %914 = vmatpush.bf16.msra.mxu0 %v833
        %915 = vmatpush.bf16.msra.mxu0 %v826
        %916 = vmatpush.bf16.msra.mxu0 %v819
        %917 = vmatpush.bf16.msra.mxu0 %v812
        %918 = vmatpush.bf16.msra.mxu0 %v805
        %919 = vmatpush.bf16.msra.mxu0 %v798
        %920 = vmatpush.bf16.msra.mxu0 %v791
        %921 = vmatpush.bf16.msra.mxu0 %v784
        %922 = vmatmul.bf16.gmra.mxu0 %v636
        %v923 = vpop.f32.mrf.mxu0
        %v924 = vadd.f32 0.0, %v923
        %v925 = vpop.f32.mrf.mxu0
        %v926 = vadd.f32 0.0, %v925
        %927 = vdwg.mxu0
        %928 = vmatpush.bf16.msra.mxu0 0
        %929 = vmatpush.bf16.msra.mxu0 0
        %930 = vmatpush.bf16.msra.mxu0 0
        %931 = vmatpush.bf16.msra.mxu0 0
        %932 = vmatpush.bf16.msra.mxu0 0
        %933 = vmatpush.bf16.msra.mxu0 0
        %934 = vmatpush.bf16.msra.mxu0 0
        %935 = vmatpush.bf16.msra.mxu0 %v840
        %936 = vmatmul.bf16.gmra.mxu0 %v912
        %v937 = vpop.f32.mrf.mxu0
        %v938 = vadd.f32 %v924, %v937
        %v939 = vpop.f32.mrf.mxu0
        %v940 = vadd.f32 %v926, %v939
        %941 = vdwg.mxu0
        %942 = vmatpush.bf16.msra.mxu0 %v834
        %943 = vmatpush.bf16.msra.mxu0 %v827
        %944 = vmatpush.bf16.msra.mxu0 %v820
        %945 = vmatpush.bf16.msra.mxu0 %v813
        %946 = vmatpush.bf16.msra.mxu0 %v806
        %947 = vmatpush.bf16.msra.mxu0 %v799
        %948 = vmatpush.bf16.msra.mxu0 %v792
        %949 = vmatpush.bf16.msra.mxu0 %v785
        %950 = vmatmul.bf16.gmra.mxu0 %v636
        %v951 = vpop.f32.mrf.mxu0
        %v952 = vadd.f32 0.0, %v951
        %v953 = vpop.f32.mrf.mxu0
        %v954 = vadd.f32 0.0, %v953
        %955 = vdwg.mxu0
        %956 = vmatpush.bf16.msra.mxu0 0
        %957 = vmatpush.bf16.msra.mxu0 0
        %958 = vmatpush.bf16.msra.mxu0 0
        %959 = vmatpush.bf16.msra.mxu0 0
        %960 = vmatpush.bf16.msra.mxu0 0
        %961 = vmatpush.bf16.msra.mxu0 0
        %962 = vmatpush.bf16.msra.mxu0 0
        %963 = vmatpush.bf16.msra.mxu0 %v841
        %964 = vmatmul.bf16.gmra.mxu0 %v912
        %v965 = vpop.f32.mrf.mxu0
        %v966 = vadd.f32 %v952, %v965
        %v967 = vpop.f32.mrf.mxu0
        %v968 = vadd.f32 %v954, %v967
        %969 = vdwg.mxu0
        %970 = vmatpush.bf16.msra.mxu0 %v835
        %971 = vmatpush.bf16.msra.mxu0 %v828
        %972 = vmatpush.bf16.msra.mxu0 %v821
        %973 = vmatpush.bf16.msra.mxu0 %v814
        %974 = vmatpush.bf16.msra.mxu0 %v807
        %975 = vmatpush.bf16.msra.mxu0 %v800
        %976 = vmatpush.bf16.msra.mxu0 %v793
        %977 = vmatpush.bf16.msra.mxu0 %v786
        %978 = vmatmul.bf16.gmra.mxu0 %v636
        %v979 = vpop.f32.mrf.mxu0
        %v980 = vadd.f32 0.0, %v979
        %v981 = vpop.f32.mrf.mxu0
        %v982 = vadd.f32 0.0, %v981
        %983 = vdwg.mxu0
        %984 = vmatpush.bf16.msra.mxu0 0
        %985 = vmatpush.bf16.msra.mxu0 0
        %986 = vmatpush.bf16.msra.mxu0 0
        %987 = vmatpush.bf16.msra.mxu0 0
        %988 = vmatpush.bf16.msra.mxu0 0
        %989 = vmatpush.bf16.msra.mxu0 0
        %990 = vmatpush.bf16.msra.mxu0 0
        %991 = vmatpush.bf16.msra.mxu0 %v842
        %992 = vmatmul.bf16.gmra.mxu0 %v912
        %v993 = vpop.f32.mrf.mxu0
        %v994 = vadd.f32 %v980, %v993
        %v995 = vpop.f32.mrf.mxu0
        %v996 = vadd.f32 %v982, %v995
        %997 = vdwg.mxu0
        %998 = vmatpush.bf16.msra.mxu0 %v836
        %999 = vmatpush.bf16.msra.mxu0 %v829
        %1000 = vmatpush.bf16.msra.mxu0 %v822
        %1001 = vmatpush.bf16.msra.mxu0 %v815
        %1002 = vmatpush.bf16.msra.mxu0 %v808
        %1003 = vmatpush.bf16.msra.mxu0 %v801
        %1004 = vmatpush.bf16.msra.mxu0 %v794
        %1005 = vmatpush.bf16.msra.mxu0 %v787
        %1006 = vmatmul.bf16.gmra.mxu0 %v636
        %v1007 = vpop.f32.mrf.mxu0
        %v1008 = vadd.f32 0.0, %v1007
        %v1009 = vpop.f32.mrf.mxu0
        %v1010 = vadd.f32 0.0, %v1009
        %1011 = vdwg.mxu0
        %1012 = vmatpush.bf16.msra.mxu0 0
        %1013 = vmatpush.bf16.msra.mxu0 0
        %1014 = vmatpush.bf16.msra.mxu0 0
        %1015 = vmatpush.bf16.msra.mxu0 0
        %1016 = vmatpush.bf16.msra.mxu0 0
        %1017 = vmatpush.bf16.msra.mxu0 0
        %1018 = vmatpush.bf16.msra.mxu0 0
        %1019 = vmatpush.bf16.msra.mxu0 %v843
        %1020 = vmatmul.bf16.gmra.mxu0 %v912
        %v1021 = vpop.f32.mrf.mxu0
        %v1022 = vadd.f32 %v1008, %v1021
        %v1023 = vpop.f32.mrf.mxu0
        %v1024 = vadd.f32 %v1010, %v1023
        %1025 = vdwg.mxu0
        %1026 = vmatpush.bf16.msra.mxu0 %v837
        %1027 = vmatpush.bf16.msra.mxu0 %v830
        %1028 = vmatpush.bf16.msra.mxu0 %v823
        %1029 = vmatpush.bf16.msra.mxu0 %v816
        %1030 = vmatpush.bf16.msra.mxu0 %v809
        %1031 = vmatpush.bf16.msra.mxu0 %v802
        %1032 = vmatpush.bf16.msra.mxu0 %v795
        %1033 = vmatpush.bf16.msra.mxu0 %v788
        %1034 = vmatmul.bf16.gmra.mxu0 %v636
        %v1035 = vpop.f32.mrf.mxu0
        %v1036 = vadd.f32 0.0, %v1035
        %v1037 = vpop.f32.mrf.mxu0
        %v1038 = vadd.f32 0.0, %v1037
        %1039 = vdwg.mxu0
        %1040 = vmatpush.bf16.msra.mxu0 0
        %1041 = vmatpush.bf16.msra.mxu0 0
        %1042 = vmatpush.bf16.msra.mxu0 0
        %1043 = vmatpush.bf16.msra.mxu0 0
        %1044 = vmatpush.bf16.msra.mxu0 0
        %1045 = vmatpush.bf16.msra.mxu0 0
        %1046 = vmatpush.bf16.msra.mxu0 0
        %1047 = vmatpush.bf16.msra.mxu0 %v844
        %1048 = vmatmul.bf16.gmra.mxu0 %v912
        %v1049 = vpop.f32.mrf.mxu0
        %v1050 = vadd.f32 %v1036, %v1049
        %v1051 = vpop.f32.mrf.mxu0
        %v1052 = vadd.f32 %v1038, %v1051
        %1053 = vdwg.mxu0
        %1054 = vmatpush.bf16.msra.mxu0 %v838
        %1055 = vmatpush.bf16.msra.mxu0 %v831
        %1056 = vmatpush.bf16.msra.mxu0 %v824
        %1057 = vmatpush.bf16.msra.mxu0 %v817
        %1058 = vmatpush.bf16.msra.mxu0 %v810
        %1059 = vmatpush.bf16.msra.mxu0 %v803
        %1060 = vmatpush.bf16.msra.mxu0 %v796
        %1061 = vmatpush.bf16.msra.mxu0 %v789
        %1062 = vmatmul.bf16.gmra.mxu0 %v636
        %v1063 = vpop.f32.mrf.mxu0
        %v1064 = vadd.f32 0.0, %v1063
        %v1065 = vpop.f32.mrf.mxu0
        %v1066 = vadd.f32 0.0, %v1065
        %1067 = vdwg.mxu0
        %1068 = vmatpush.bf16.msra.mxu0 0
        %1069 = vmatpush.bf16.msra.mxu0 0
        %1070 = vmatpush.bf16.msra.mxu0 0
        %1071 = vmatpush.bf16.msra.mxu0 0
        %1072 = vmatpush.bf16.msra.mxu0 0
        %1073 = vmatpush.bf16.msra.mxu0 0
        %1074 = vmatpush.bf16.msra.mxu0 0
        %1075 = vmatpush.bf16.msra.mxu0 %v845
        %1076 = vmatmul.bf16.gmra.mxu0 %v912
        %v1077 = vpop.f32.mrf.mxu0
        %v1078 = vadd.f32 %v1064, %v1077
        %v1079 = vpop.f32.mrf.mxu0
        %v1080 = vadd.f32 %v1066, %v1079
        %1081 = vdwg.mxu0
        %1082 = vmatpush.bf16.msra.mxu0 %v839
        %1083 = vmatpush.bf16.msra.mxu0 %v832
        %1084 = vmatpush.bf16.msra.mxu0 %v825
        %1085 = vmatpush.bf16.msra.mxu0 %v818
        %1086 = vmatpush.bf16.msra.mxu0 %v811
        %1087 = vmatpush.bf16.msra.mxu0 %v804
        %1088 = vmatpush.bf16.msra.mxu0 %v797
        %1089 = vmatpush.bf16.msra.mxu0 %v790
        %1090 = vmatmul.bf16.gmra.mxu0 %v636
        %v1091 = vpop.f32.mrf.mxu0
        %v1092 = vadd.f32 0.0, %v1091
        %v1093 = vpop.f32.mrf.mxu0
        %v1094 = vadd.f32 0.0, %v1093
        %1095 = vdwg.mxu0
        %1096 = vmatpush.bf16.msra.mxu0 0
        %1097 = vmatpush.bf16.msra.mxu0 0
        %1098 = vmatpush.bf16.msra.mxu0 0
        %1099 = vmatpush.bf16.msra.mxu0 0
        %1100 = vmatpush.bf16.msra.mxu0 0
        %1101 = vmatpush.bf16.msra.mxu0 0
        %1102 = vmatpush.bf16.msra.mxu0 0
        %1103 = vmatpush.bf16.msra.mxu0 %v846
        %1104 = vmatmul.bf16.gmra.mxu0 %v912
        %v1105 = vpop.f32.mrf.mxu0
        %v1106 = vadd.f32 %v1092, %v1105
        %v1107 = vpop.f32.mrf.mxu0
        %v1108 = vadd.f32 %v1094, %v1107
        %1109 = vdwg.mxu0
        %v1110 = vmax.f32 %v938, 0.0
        %v1111 = vmax.f32 %v966, 0.0
        %v1112 = vmax.f32 %v994, 0.0
        %v1113 = vmax.f32 %v1022, 0.0
        %v1114 = vmax.f32 %v1050, 0.0
        %v1115 = vmax.f32 %v1078, 0.0
        %v1116 = vmax.f32 %v1106, 0.0
        %v1117 = vmax.f32 %v940, 0.0
        %v1118 = vmax.f32 %v968, 0.0
        %v1119 = vmax.f32 %v996, 0.0
        %v1120 = vmax.f32 %v1024, 0.0
        %v1121 = vmax.f32 %v1052, 0.0
        %v1122 = vmax.f32 %v1080, 0.0
        %v1123 = vmax.f32 %v1108, 0.0
        %v1124 = vld [vmem:[#allocation7] sm:$0xff]
        %v1126 = vperm.slane %v1124, 0
        %v1127 = vperm.slane %v1124, 1
        %v1128 = vperm.slane %v1124, 2
        %v1129 = vperm.slane %v1124, 3
        %v1130 = vperm.slane %v1124, 4
        %v1131 = vperm.slane %v1124, 5
        %v1132 = vperm.slane %v1124, 6
        %v1140 = vmul.f32 %v1110, %v1126
        %v1141 = vmul.f32 %v1111, %v1127
        %v1142 = vmul.f32 %v1112, %v1128
        %v1143 = vmul.f32 %v1113, %v1129
        %v1144 = vmul.f32 %v1114, %v1130
        %v1145 = vmul.f32 %v1115, %v1131
        %v1146 = vmul.f32 %v1116, %v1132
        %v1147 = vmul.f32 %v1117, %v1126
        %v1148 = vmul.f32 %v1118, %v1127
        %v1149 = vmul.f32 %v1119, %v1128
        %v1150 = vmul.f32 %v1120, %v1129
        %v1151 = vmul.f32 %v1121, %v1130
        %v1152 = vmul.f32 %v1122, %v1131
        %v1153 = vmul.f32 %v1123, %v1132
        %v1154 = vpack.c.bf16 %v1141, %v1140
        %v1155 = vpack.c.bf16 %v1143, %v1142
        %v1156 = vpack.c.bf16 %v1145, %v1144
        %v1157 = vpack.c.bf16 %v1146, %v1146
        %v1158 = vpack.c.bf16 %v1148, %v1147
        %v1159 = vpack.c.bf16 %v1150, %v1149
        %v1160 = vpack.c.bf16 %v1152, %v1151
        %v1161 = vpack.c.bf16 %v1153, %v1153
        %v1168 = vunpack.c.l.b16 %v1154
        %v1169 = vunpack.c.h.b16 %v1154
        %v1170 = vunpack.c.l.b16 %v1155
        %v1171 = vunpack.c.h.b16 %v1155
        %v1172 = vunpack.c.l.b16 %v1156
        %v1173 = vunpack.c.h.b16 %v1156
        %v1174 = vunpack.c.l.b16 %v1158
        %v1175 = vunpack.c.h.b16 %v1158
        %v1176 = vunpack.c.l.b16 %v1159
        %v1177 = vunpack.c.h.b16 %v1159
        %v1178 = vunpack.c.l.b16 %v1160
        %v1179 = vunpack.c.h.b16 %v1160
        %v1180 = vpack.c.b16 %v1174, %v1168
        %v1181 = vpack.c.b16 %v1175, %v1169
        %v1182 = vpack.c.b16 %v1176, %v1170
        %v1183 = vpack.c.b16 %v1177, %v1171
        %v1184 = vpack.c.b16 %v1178, %v1172
        %v1185 = vpack.c.b16 %v1179, %v1173
        %v1194 = vunpack.c.l.b16 %v1157
        %v1195 = vunpack.c.l.b16 %v1161
        %v1196 = vpack.c.b16 %v1195, %v1194
        %1197 = vrot.lane.b32.xlu0 %v1180, 127
        %v1198 = vpop.permute.xlu0 %1197
        %1199 = vrot.lane.b32.xlu0 %v1181, 127
        %v1200 = vpop.permute.xlu0 %1199
        %1201 = vrot.lane.b32.xlu0 %v1182, 127
        %v1202 = vpop.permute.xlu0 %1201
        %1203 = vrot.lane.b32.xlu0 %v1183, 127
        %v1204 = vpop.permute.xlu0 %1203
        %1205 = vrot.lane.b32.xlu0 %v1184, 127
        %v1206 = vpop.permute.xlu0 %1205
        %1207 = vrot.lane.b32.xlu0 %v1185, 127
        %v1208 = vpop.permute.xlu0 %1207
        %1209 = vrot.lane.b32.xlu0 %v1196, 127
        %v1210 = vpop.permute.xlu0 %1209
        %v1211 = vsel %vm455, %v1198, %v1200
        %v1212 = vsel %vm455, %v1200, %v1202
        %v1213 = vsel %vm455, %v1202, %v1204
        %v1214 = vsel %vm455, %v1204, %v1206
        %v1215 = vsel %vm455, %v1206, %v1208
        %v1216 = vsel %vm455, %v1208, %v1210
        %1223 = vrot.lane.b32.xlu0 %v1180, 126
        %v1224 = vpop.permute.xlu0 %1223
        %1225 = vrot.lane.b32.xlu0 %v1181, 126
        %v1226 = vpop.permute.xlu0 %1225
        %1227 = vrot.lane.b32.xlu0 %v1182, 126
        %v1228 = vpop.permute.xlu0 %1227
        %1229 = vrot.lane.b32.xlu0 %v1183, 126
        %v1230 = vpop.permute.xlu0 %1229
        %1231 = vrot.lane.b32.xlu0 %v1184, 126
        %v1232 = vpop.permute.xlu0 %1231
        %1233 = vrot.lane.b32.xlu0 %v1185, 126
        %v1234 = vpop.permute.xlu0 %1233
        %1235 = vrot.lane.b32.xlu0 %v1196, 126
        %v1236 = vpop.permute.xlu0 %1235
        %v1237 = vsel %vm479, %v1224, %v1226
        %v1238 = vsel %vm479, %v1226, %v1228
        %v1239 = vsel %vm479, %v1228, %v1230
        %v1240 = vsel %vm479, %v1230, %v1232
        %v1241 = vsel %vm479, %v1232, %v1234
        %v1242 = vsel %vm479, %v1234, %v1236
        %1249 = vrot.lane.b32.xlu0 %v1180, 110
        %v1250 = vpop.permute.xlu0 %1249
        %1251 = vrot.lane.b32.xlu0 %v1181, 110
        %v1252 = vpop.permute.xlu0 %1251
        %1253 = vrot.lane.b32.xlu0 %v1182, 110
        %v1254 = vpop.permute.xlu0 %1253
        %1255 = vrot.lane.b32.xlu0 %v1183, 110
        %v1256 = vpop.permute.xlu0 %1255
        %1257 = vrot.lane.b32.xlu0 %v1184, 110
        %v1258 = vpop.permute.xlu0 %1257
        %1259 = vrot.lane.b32.xlu0 %v1185, 110
        %v1260 = vpop.permute.xlu0 %1259
        %1261 = vrot.lane.b32.xlu0 %v1196, 110
        %v1262 = vpop.permute.xlu0 %1261
        %v1263 = vsel %vm503, %v1250, %v1252
        %v1264 = vsel %vm503, %v1252, %v1254
        %v1265 = vsel %vm503, %v1254, %v1256
        %v1266 = vsel %vm503, %v1256, %v1258
        %v1267 = vsel %vm503, %v1258, %v1260
        %v1268 = vsel %vm503, %v1260, %v1262
        %1275 = vrot.lane.b32.xlu0 %v1180, 109
        %v1276 = vpop.permute.xlu0 %1275
        %1277 = vrot.lane.b32.xlu0 %v1181, 109
        %v1278 = vpop.permute.xlu0 %1277
        %1279 = vrot.lane.b32.xlu0 %v1182, 109
        %v1280 = vpop.permute.xlu0 %1279
        %1281 = vrot.lane.b32.xlu0 %v1183, 109
        %v1282 = vpop.permute.xlu0 %1281
        %1283 = vrot.lane.b32.xlu0 %v1184, 109
        %v1284 = vpop.permute.xlu0 %1283
        %1285 = vrot.lane.b32.xlu0 %v1185, 109
        %v1286 = vpop.permute.xlu0 %1285
        %1287 = vrot.lane.b32.xlu0 %v1196, 109
        %v1288 = vpop.permute.xlu0 %1287
        %v1289 = vsel %vm527, %v1276, %v1278
        %v1290 = vsel %vm527, %v1278, %v1280
        %v1291 = vsel %vm527, %v1280, %v1282
        %v1292 = vsel %vm527, %v1282, %v1284
        %v1293 = vsel %vm527, %v1284, %v1286
        %v1294 = vsel %vm527, %v1286, %v1288
        %1301 = vrot.lane.b32.xlu0 %v1180, 108
        %v1302 = vpop.permute.xlu0 %1301
        %1303 = vrot.lane.b32.xlu0 %v1181, 108
        %v1304 = vpop.permute.xlu0 %1303
        %1305 = vrot.lane.b32.xlu0 %v1182, 108
        %v1306 = vpop.permute.xlu0 %1305
        %1307 = vrot.lane.b32.xlu0 %v1183, 108
        %v1308 = vpop.permute.xlu0 %1307
        %1309 = vrot.lane.b32.xlu0 %v1184, 108
        %v1310 = vpop.permute.xlu0 %1309
        %1311 = vrot.lane.b32.xlu0 %v1185, 108
        %v1312 = vpop.permute.xlu0 %1311
        %1313 = vrot.lane.b32.xlu0 %v1196, 108
        %v1314 = vpop.permute.xlu0 %1313
        %v1315 = vsel %vm551, %v1302, %v1304
        %v1316 = vsel %vm551, %v1304, %v1306
        %v1317 = vsel %vm551, %v1306, %v1308
        %v1318 = vsel %vm551, %v1308, %v1310
        %v1319 = vsel %vm551, %v1310, %v1312
        %v1320 = vsel %vm551, %v1312, %v1314
        %1327 = vrot.lane.b32.xlu0 %v1180, 92
        %v1328 = vpop.permute.xlu0 %1327
        %1329 = vrot.lane.b32.xlu0 %v1181, 92
        %v1330 = vpop.permute.xlu0 %1329
        %1331 = vrot.lane.b32.xlu0 %v1182, 92
        %v1332 = vpop.permute.xlu0 %1331
        %1333 = vrot.lane.b32.xlu0 %v1183, 92
        %v1334 = vpop.permute.xlu0 %1333
        %1335 = vrot.lane.b32.xlu0 %v1184, 92
        %v1336 = vpop.permute.xlu0 %1335
        %1337 = vrot.lane.b32.xlu0 %v1185, 92
        %v1338 = vpop.permute.xlu0 %1337
        %1339 = vrot.lane.b32.xlu0 %v1196, 92
        %v1340 = vpop.permute.xlu0 %1339
        %v1341 = vsel %vm575, %v1328, %v1330
        %v1342 = vsel %vm575, %v1330, %v1332
        %v1343 = vsel %vm575, %v1332, %v1334
        %v1344 = vsel %vm575, %v1334, %v1336
        %v1345 = vsel %vm575, %v1336, %v1338
        %v1346 = vsel %vm575, %v1338, %v1340
        %1353 = vrot.lane.b32.xlu0 %v1180, 91
        %v1354 = vpop.permute.xlu0 %1353
        %1355 = vrot.lane.b32.xlu0 %v1181, 91
        %v1356 = vpop.permute.xlu0 %1355
        %1357 = vrot.lane.b32.xlu0 %v1182, 91
        %v1358 = vpop.permute.xlu0 %1357
        %1359 = vrot.lane.b32.xlu0 %v1183, 91
        %v1360 = vpop.permute.xlu0 %1359
        %1361 = vrot.lane.b32.xlu0 %v1184, 91
        %v1362 = vpop.permute.xlu0 %1361
        %1363 = vrot.lane.b32.xlu0 %v1185, 91
        %v1364 = vpop.permute.xlu0 %1363
        %1365 = vrot.lane.b32.xlu0 %v1196, 91
        %v1366 = vpop.permute.xlu0 %1365
        %v1367 = vsel %vm599, %v1354, %v1356
        %v1368 = vsel %vm599, %v1356, %v1358
        %v1369 = vsel %vm599, %v1358, %v1360
        %v1370 = vsel %vm599, %v1360, %v1362
        %v1371 = vsel %vm599, %v1362, %v1364
        %v1372 = vsel %vm599, %v1364, %v1366
        %1379 = vrot.lane.b32.xlu0 %v1180, 90
        %v1380 = vpop.permute.xlu0 %1379
        %1381 = vrot.lane.b32.xlu0 %v1181, 90
        %v1382 = vpop.permute.xlu0 %1381
        %1383 = vrot.lane.b32.xlu0 %v1182, 90
        %v1384 = vpop.permute.xlu0 %1383
        %1385 = vrot.lane.b32.xlu0 %v1183, 90
        %v1386 = vpop.permute.xlu0 %1385
        %1387 = vrot.lane.b32.xlu0 %v1184, 90
        %v1388 = vpop.permute.xlu0 %1387
        %1389 = vrot.lane.b32.xlu0 %v1185, 90
        %v1390 = vpop.permute.xlu0 %1389
        %1391 = vrot.lane.b32.xlu0 %v1196, 90
        %v1392 = vpop.permute.xlu0 %1391
        %v1393 = vsel %vm621, %v1380, %v1382
        %v1394 = vsel %vm621, %v1382, %v1384
        %v1395 = vsel %vm621, %v1384, %v1386
        %v1396 = vsel %vm621, %v1386, %v1388
        %v1397 = vsel %vm621, %v1388, %v1390
        %v1398 = vsel %vm621, %v1390, %v1392
        %v1405 = vld [vmem:[%s5] sm:$0xff]
        %v1406 = vld [vmem:[%s5 + $0x8] sm:$0xff]
        %v1409 = vunpack.c.l.b16 %v1405
        %v1410 = vunpack.c.h.b16 %v1405
        %v1411 = vunpack.c.l.b16 %v1406
        %v1412 = vunpack.c.h.b16 %v1406
        %v1413 = vpack.c.b16 %v1411, %v1409
        %v1414 = vpack.c.b16 %v1412, %v1410
        %v1417 = vsel %vm910, %v1414, 0
        %1419 = vmatpush.bf16.msra.mxu0 %v1367
        %1420 = vmatpush.bf16.msra.mxu0 %v1341
        %1421 = vmatpush.bf16.msra.mxu0 %v1315
        %1422 = vmatpush.bf16.msra.mxu0 %v1289
        %1423 = vmatpush.bf16.msra.mxu0 %v1263
        %1424 = vmatpush.bf16.msra.mxu0 %v1237
        %1425 = vmatpush.bf16.msra.mxu0 %v1211
        %1426 = vmatpush.bf16.msra.mxu0 %v1180
        %1427 = vmatmul.bf16.gmra.mxu0 %v1413
        %v1428 = vpop.f32.mrf.mxu0
        %v1429 = vadd.f32 0.0, %v1428
        %v1430 = vpop.f32.mrf.mxu0
        %v1431 = vadd.f32 0.0, %v1430
        %1432 = vdwg.mxu0
        %1433 = vmatpush.bf16.msra.mxu0 0
        %1434 = vmatpush.bf16.msra.mxu0 0
        %1435 = vmatpush.bf16.msra.mxu0 0
        %1436 = vmatpush.bf16.msra.mxu0 0
        %1437 = vmatpush.bf16.msra.mxu0 0
        %1438 = vmatpush.bf16.msra.mxu0 0
        %1439 = vmatpush.bf16.msra.mxu0 0
        %1440 = vmatpush.bf16.msra.mxu0 %v1393
        %1441 = vmatmul.bf16.gmra.mxu0 %v1417
        %v1442 = vpop.f32.mrf.mxu0
        %v1443 = vadd.f32 %v1429, %v1442
        %v1444 = vpop.f32.mrf.mxu0
        %v1445 = vadd.f32 %v1431, %v1444
        %1446 = vdwg.mxu0
        %1447 = vmatpush.bf16.msra.mxu0 %v1368
        %1448 = vmatpush.bf16.msra.mxu0 %v1342
        %1449 = vmatpush.bf16.msra.mxu0 %v1316
        %1450 = vmatpush.bf16.msra.mxu0 %v1290
        %1451 = vmatpush.bf16.msra.mxu0 %v1264
        %1452 = vmatpush.bf16.msra.mxu0 %v1238
        %1453 = vmatpush.bf16.msra.mxu0 %v1212
        %1454 = vmatpush.bf16.msra.mxu0 %v1181
        %1455 = vmatmul.bf16.gmra.mxu0 %v1413
        %v1456 = vpop.f32.mrf.mxu0
        %v1457 = vadd.f32 0.0, %v1456
        %v1458 = vpop.f32.mrf.mxu0
        %v1459 = vadd.f32 0.0, %v1458
        %1460 = vdwg.mxu0
        %1461 = vmatpush.bf16.msra.mxu0 0
        %1462 = vmatpush.bf16.msra.mxu0 0
        %1463 = vmatpush.bf16.msra.mxu0 0
        %1464 = vmatpush.bf16.msra.mxu0 0
        %1465 = vmatpush.bf16.msra.mxu0 0
        %1466 = vmatpush.bf16.msra.mxu0 0
        %1467 = vmatpush.bf16.msra.mxu0 0
        %1468 = vmatpush.bf16.msra.mxu0 %v1394
        %1469 = vmatmul.bf16.gmra.mxu0 %v1417
        %v1470 = vpop.f32.mrf.mxu0
        %v1471 = vadd.f32 %v1457, %v1470
        %v1472 = vpop.f32.mrf.mxu0
        %v1473 = vadd.f32 %v1459, %v1472
        %1474 = vdwg.mxu0
        %1475 = vmatpush.bf16.msra.mxu0 %v1369
        %1476 = vmatpush.bf16.msra.mxu0 %v1343
        %1477 = vmatpush.bf16.msra.mxu0 %v1317
        %1478 = vmatpush.bf16.msra.mxu0 %v1291
        %1479 = vmatpush.bf16.msra.mxu0 %v1265
        %1480 = vmatpush.bf16.msra.mxu0 %v1239
        %1481 = vmatpush.bf16.msra.mxu0 %v1213
        %1482 = vmatpush.bf16.msra.mxu0 %v1182
        %1483 = vmatmul.bf16.gmra.mxu0 %v1413
        %v1484 = vpop.f32.mrf.mxu0
        %v1485 = vadd.f32 0.0, %v1484
        %v1486 = vpop.f32.mrf.mxu0
        %v1487 = vadd.f32 0.0, %v1486
        %1488 = vdwg.mxu0
        %1489 = vmatpush.bf16.msra.mxu0 0
        %1490 = vmatpush.bf16.msra.mxu0 0
        %1491 = vmatpush.bf16.msra.mxu0 0
        %1492 = vmatpush.bf16.msra.mxu0 0
        %1493 = vmatpush.bf16.msra.mxu0 0
        %1494 = vmatpush.bf16.msra.mxu0 0
        %1495 = vmatpush.bf16.msra.mxu0 0
        %1496 = vmatpush.bf16.msra.mxu0 %v1395
        %1497 = vmatmul.bf16.gmra.mxu0 %v1417
        %v1498 = vpop.f32.mrf.mxu0
        %v1499 = vadd.f32 %v1485, %v1498
        %v1500 = vpop.f32.mrf.mxu0
        %v1501 = vadd.f32 %v1487, %v1500
        %1502 = vdwg.mxu0
        %1503 = vmatpush.bf16.msra.mxu0 %v1370
        %1504 = vmatpush.bf16.msra.mxu0 %v1344
        %1505 = vmatpush.bf16.msra.mxu0 %v1318
        %1506 = vmatpush.bf16.msra.mxu0 %v1292
        %1507 = vmatpush.bf16.msra.mxu0 %v1266
        %1508 = vmatpush.bf16.msra.mxu0 %v1240
        %1509 = vmatpush.bf16.msra.mxu0 %v1214
        %1510 = vmatpush.bf16.msra.mxu0 %v1183
        %1511 = vmatmul.bf16.gmra.mxu0 %v1413
        %v1512 = vpop.f32.mrf.mxu0
        %v1513 = vadd.f32 0.0, %v1512
        %v1514 = vpop.f32.mrf.mxu0
        %v1515 = vadd.f32 0.0, %v1514
        %1516 = vdwg.mxu0
        %1517 = vmatpush.bf16.msra.mxu0 0
        %1518 = vmatpush.bf16.msra.mxu0 0
        %1519 = vmatpush.bf16.msra.mxu0 0
        %1520 = vmatpush.bf16.msra.mxu0 0
        %1521 = vmatpush.bf16.msra.mxu0 0
        %1522 = vmatpush.bf16.msra.mxu0 0
        %1523 = vmatpush.bf16.msra.mxu0 0
        %1524 = vmatpush.bf16.msra.mxu0 %v1396
        %1525 = vmatmul.bf16.gmra.mxu0 %v1417
        %v1526 = vpop.f32.mrf.mxu0
        %v1527 = vadd.f32 %v1513, %v1526
        %v1528 = vpop.f32.mrf.mxu0
        %v1529 = vadd.f32 %v1515, %v1528
        %1530 = vdwg.mxu0
        %1531 = vmatpush.bf16.msra.mxu0 %v1371
        %1532 = vmatpush.bf16.msra.mxu0 %v1345
        %1533 = vmatpush.bf16.msra.mxu0 %v1319
        %1534 = vmatpush.bf16.msra.mxu0 %v1293
        %1535 = vmatpush.bf16.msra.mxu0 %v1267
        %1536 = vmatpush.bf16.msra.mxu0 %v1241
        %1537 = vmatpush.bf16.msra.mxu0 %v1215
        %1538 = vmatpush.bf16.msra.mxu0 %v1184
        %1539 = vmatmul.bf16.gmra.mxu0 %v1413
        %v1540 = vpop.f32.mrf.mxu0
        %v1541 = vadd.f32 0.0, %v1540
        %v1542 = vpop.f32.mrf.mxu0
        %v1543 = vadd.f32 0.0, %v1542
        %1544 = vdwg.mxu0
        %1545 = vmatpush.bf16.msra.mxu0 0
        %1546 = vmatpush.bf16.msra.mxu0 0
        %1547 = vmatpush.bf16.msra.mxu0 0
        %1548 = vmatpush.bf16.msra.mxu0 0
        %1549 = vmatpush.bf16.msra.mxu0 0
        %1550 = vmatpush.bf16.msra.mxu0 0
        %1551 = vmatpush.bf16.msra.mxu0 0
        %1552 = vmatpush.bf16.msra.mxu0 %v1397
        %1553 = vmatmul.bf16.gmra.mxu0 %v1417
        %v1554 = vpop.f32.mrf.mxu0
        %v1555 = vadd.f32 %v1541, %v1554
        %v1556 = vpop.f32.mrf.mxu0
        %v1557 = vadd.f32 %v1543, %v1556
        %1558 = vdwg.mxu0
        %1559 = vmatpush.bf16.msra.mxu0 %v1372
        %1560 = vmatpush.bf16.msra.mxu0 %v1346
        %1561 = vmatpush.bf16.msra.mxu0 %v1320
        %1562 = vmatpush.bf16.msra.mxu0 %v1294
        %1563 = vmatpush.bf16.msra.mxu0 %v1268
        %1564 = vmatpush.bf16.msra.mxu0 %v1242
        %1565 = vmatpush.bf16.msra.mxu0 %v1216
        %1566 = vmatpush.bf16.msra.mxu0 %v1185
        %1567 = vmatmul.bf16.gmra.mxu0 %v1413
        %v1568 = vpop.f32.mrf.mxu0
        %v1569 = vadd.f32 0.0, %v1568
        %v1570 = vpop.f32.mrf.mxu0
        %v1571 = vadd.f32 0.0, %v1570
        %1572 = vdwg.mxu0
        %1573 = vmatpush.bf16.msra.mxu0 0
        %1574 = vmatpush.bf16.msra.mxu0 0
        %1575 = vmatpush.bf16.msra.mxu0 0
        %1576 = vmatpush.bf16.msra.mxu0 0
        %1577 = vmatpush.bf16.msra.mxu0 0
        %1578 = vmatpush.bf16.msra.mxu0 0
        %1579 = vmatpush.bf16.msra.mxu0 0
        %1580 = vmatpush.bf16.msra.mxu0 %v1398
        %1581 = vmatmul.bf16.gmra.mxu0 %v1417
        %v1582 = vpop.f32.mrf.mxu0
        %v1583 = vadd.f32 %v1569, %v1582
        %v1584 = vpop.f32.mrf.mxu0
        %v1585 = vadd.f32 %v1571, %v1584
        %1586 = vdwg.mxu0
        %v1587 = vld [vmem:[%s3] sm:$0x7]
        %v1588 = vld [vmem:[%s6] sm:$0xff]
        %v1589 = vld [vmem:[%s6 + $0x8] sm:$0xff]
        %v1590 = vld [vmem:[%s7] sm:$0xff]
        %v1591 = vld [vmem:[%s7 + $0x8] sm:$0xff]
        %v1593 = vperm.slane %v1587, 0
        %v1594 = vperm.slane %v1587, 1
        %v1595 = vperm.slane %v1587, 2
        %v1599 = vmul.f32 %v1443, %v1593
        %v1600 = vmul.f32 %v1471, %v1594
        %v1601 = vmul.f32 %v1499, %v1595
        %v1602 = vmul.f32 %v1445, %v1593
        %v1603 = vmul.f32 %v1473, %v1594
        %v1604 = vmul.f32 %v1501, %v1595
        %v1605 = vadd.f32 %v1599, %v1600
        %v1606 = vadd.f32 %v1605, %v1601
        %1607 = vadd.xlane.f32.xlu0 %v1606
        %v1608 = vpop.xlane.xlu0 %1607
        %v1609 = vadd.f32 %v1602, %v1603
        %v1610 = vadd.f32 %v1609, %v1604
        %1611 = vadd.xlane.f32.xlu0 %v1610
        %v1612 = vpop.xlane.xlu0 %1611
        %v1613 = vmul.f32 %v1588, %v1608
        %v1614 = vmul.f32 %v1589, %v1612
        %vm1615 = vcmask 31744
        %v1616 = vsel %vm1615, %v1613, 0.0
        %v1617 = vsel %vm1615, %v1614, 0.0
        %v1618 = vadd.f32 %v1616, %v1617
        %v1619 = vrot.slane %v1618, 4
        %v1620 = vadd.f32 %v1618, %v1619
        %v1621 = vrot.slane %v1620, 2
        %v1622 = vadd.f32 %v1620, %v1621
        %v1623 = vrot.slane %v1622, 1
        %v1624 = vadd.f32 %v1622, %v1623
        %v1625 = vmax.f32 %v1624, 0.0
        %v1626 = vmul.f32 %v1590, %v1625
        %v1627 = vmul.f32 %v1591, %v1625
        %v1628 = vsel %vm1615, %v1626, 0.0
        %1629 = vadd.xlane.f32.xlu0 %v1628
        %v1630 = vpop.xlane.xlu0 %1629
        %v1631 = vsel %vm1615, %v1627, 0.0
        %1632 = vadd.xlane.f32.xlu0 %v1631
        %v1633 = vpop.xlane.xlu0 %1632
        %v1634 = vxor.u32 %v1630, 2147483648
        %v1635 = vxor.u32 %v1633, 2147483648
        %v1636 = vmul.f32 %v1634, 1.442695
        %v1637 = vpow.pop %v1636
        %v1638 = vmul.f32 %v1635, 1.442695
        %v1639 = vpow.pop %v1638
        %v1640 = vadd.f32 %v1637, 1.0
        %v1641 = vadd.f32 %v1639, 1.0
        %v1642 = vrcp.pop %v1640
        %v1643 = vmul.f32 %v1640, %v1642
        %v1644 = vsub.f32 1.0, %v1643
        %v1645 = vmul.f32 %v1642, %v1644
        %v1646 = vadd.f32 %v1642, %v1645
        %vm1647 = vweird.f32 %v1640
        %vm1648 = vweird.f32 %v1642
        %vm1649 = vmor %vm1647, %vm1648
        %v1650 = vsel %vm1649, %v1642, %v1646
        %v1651 = vand.u32 2147483647, %v1640
        %vm1652 = vcmp.eq.f32.partialorder %v1651, 8.507059e+37
        %v1653 = vand.u32 %v1640, 2147483648
        %v1654 = vor.u32 1.1754944e-38, %v1653
        %v1655 = vsel %vm1652, %v1654, %v1650
        %v1656 = vmul.f32 1.0, %v1655
        %v1657 = vrcp.pop %v1641
        %v1658 = vmul.f32 %v1641, %v1657
        %v1659 = vsub.f32 1.0, %v1658
        %v1660 = vmul.f32 %v1657, %v1659
        %v1661 = vadd.f32 %v1657, %v1660
        %vm1662 = vweird.f32 %v1641
        %vm1663 = vweird.f32 %v1657
        %vm1664 = vmor %vm1662, %vm1663
        %v1665 = vsel %vm1664, %v1657, %v1661
        %v1666 = vand.u32 2147483647, %v1641
        %vm1667 = vcmp.eq.f32.partialorder %v1666, 8.507059e+37
        %v1668 = vand.u32 %v1641, 2147483648
        %v1669 = vor.u32 1.1754944e-38, %v1668
        %v1670 = vsel %vm1667, %v1669, %v1665
        %v1671 = vmul.f32 1.0, %v1670
        %v1672 = vmul.f32 %v1443, %v1656
        %v1673 = vmul.f32 %v1471, %v1656
        %v1674 = vmul.f32 %v1499, %v1656
        %v1675 = vmul.f32 %v1445, %v1671
        %v1676 = vmul.f32 %v1473, %v1671
        %v1677 = vmul.f32 %v1501, %v1671
        %v1678 = vld [vmem:[%s338] sm:$0xff]
        %v1679 = vld [vmem:[%s338 + $0x8] sm:$0xff]
        %v1680 = vld [vmem:[%s338 + $0x10] sm:$0xff]
        %v1681 = vld [vmem:[%s338 + $0x30] sm:$0xff]
        %v1682 = vld [vmem:[%s338 + $0x38] sm:$0xff]
        %v1683 = vld [vmem:[%s338 + $0x40] sm:$0xff]
        %v1684 = vadd.f32 %v1672, %v1678
        %v1685 = vadd.f32 %v1673, %v1679
        %v1686 = vadd.f32 %v1674, %v1680
        %v1687 = vadd.f32 %v1675, %v1681
        %v1688 = vadd.f32 %v1676, %v1682
        %v1689 = vadd.f32 %v1677, %v1683
        %1690 = vst [vmem:[%s381] sm:$0xff] %v1684
        %1691 = vst [vmem:[%s381 + $0x8] sm:$0xff] %v1685
        %1692 = vst [vmem:[%s381 + $0x10] sm:$0xff] %v1686
        %1693 = vst [vmem:[%s381 + $0x30] sm:$0xff] %v1687
        %1694 = vst [vmem:[%s381 + $0x38] sm:$0xff] %v1688
        %1695 = vst [vmem:[%s381 + $0x40] sm:$0xff] %v1689
        %v1696 = vmul.f32 %v1527, %v1593
        %v1697 = vmul.f32 %v1555, %v1594
        %v1698 = vmul.f32 %v1583, %v1595
        %v1699 = vmul.f32 %v1529, %v1593
        %v1700 = vmul.f32 %v1557, %v1594
        %v1701 = vmul.f32 %v1585, %v1595
        %v1702 = vadd.f32 %v1696, %v1697
        %v1703 = vadd.f32 %v1702, %v1698
        %1704 = vadd.xlane.f32.xlu0 %v1703
        %v1705 = vpop.xlane.xlu0 %1704
        %v1706 = vadd.f32 %v1699, %v1700
        %v1707 = vadd.f32 %v1706, %v1701
        %1708 = vadd.xlane.f32.xlu0 %v1707
        %v1709 = vpop.xlane.xlu0 %1708
        %v1710 = vmul.f32 %v1588, %v1705
        %v1711 = vmul.f32 %v1589, %v1709
        %v1712 = vsel %vm1615, %v1710, 0.0
        %v1713 = vsel %vm1615, %v1711, 0.0
        %v1714 = vadd.f32 %v1712, %v1713
        %v1715 = vrot.slane %v1714, 4
        %v1716 = vadd.f32 %v1714, %v1715
        %v1717 = vrot.slane %v1716, 2
        %v1718 = vadd.f32 %v1716, %v1717
        %v1719 = vrot.slane %v1718, 1
        %v1720 = vadd.f32 %v1718, %v1719
        %v1721 = vmax.f32 %v1720, 0.0
        %v1722 = vmul.f32 %v1590, %v1721
        %v1723 = vmul.f32 %v1591, %v1721
        %v1724 = vsel %vm1615, %v1722, 0.0
        %1725 = vadd.xlane.f32.xlu0 %v1724
        %v1726 = vpop.xlane.xlu0 %1725
        %v1727 = vsel %vm1615, %v1723, 0.0
        %1728 = vadd.xlane.f32.xlu0 %v1727
        %v1729 = vpop.xlane.xlu0 %1728
        %v1730 = vxor.u32 %v1726, 2147483648
        %v1731 = vxor.u32 %v1729, 2147483648
        %v1732 = vmul.f32 %v1730, 1.442695
        %v1733 = vpow.pop %v1732
        %v1734 = vmul.f32 %v1731, 1.442695
        %v1735 = vpow.pop %v1734
        %v1736 = vadd.f32 %v1733, 1.0
        %v1737 = vadd.f32 %v1735, 1.0
        %v1738 = vrcp.pop %v1736
        %v1739 = vmul.f32 %v1736, %v1738
        %v1740 = vsub.f32 1.0, %v1739
        %v1741 = vmul.f32 %v1738, %v1740
        %v1742 = vadd.f32 %v1738, %v1741
        %vm1743 = vweird.f32 %v1736
        %vm1744 = vweird.f32 %v1738
        %vm1745 = vmor %vm1743, %vm1744
        %v1746 = vsel %vm1745, %v1738, %v1742
        %v1747 = vand.u32 2147483647, %v1736
        %vm1748 = vcmp.eq.f32.partialorder %v1747, 8.507059e+37
        %v1749 = vand.u32 %v1736, 2147483648
        %v1750 = vor.u32 1.1754944e-38, %v1749
        %v1751 = vsel %vm1748, %v1750, %v1746
        %v1752 = vmul.f32 1.0, %v1751
        %v1753 = vrcp.pop %v1737
        %v1754 = vmul.f32 %v1737, %v1753
        %v1755 = vsub.f32 1.0, %v1754
        %v1756 = vmul.f32 %v1753, %v1755
        %v1757 = vadd.f32 %v1753, %v1756
        %vm1758 = vweird.f32 %v1737
        %vm1759 = vweird.f32 %v1753
        %vm1760 = vmor %vm1758, %vm1759
        %v1761 = vsel %vm1760, %v1753, %v1757
        %v1762 = vand.u32 2147483647, %v1737
        %vm1763 = vcmp.eq.f32.partialorder %v1762, 8.507059e+37
        %v1764 = vand.u32 %v1737, 2147483648
        %v1765 = vor.u32 1.1754944e-38, %v1764
        %v1766 = vsel %vm1763, %v1765, %v1761
        %v1767 = vmul.f32 1.0, %v1766
        %v1768 = vmul.f32 %v1527, %v1752
        %v1769 = vmul.f32 %v1555, %v1752
        %v1770 = vmul.f32 %v1583, %v1752
        %v1771 = vmul.f32 %v1529, %v1767
        %v1772 = vmul.f32 %v1557, %v1767
        %v1773 = vmul.f32 %v1585, %v1767
        %v1774 = vld [vmem:[%s338 + $0x18] sm:$0xff]
        %v1775 = vld [vmem:[%s338 + $0x20] sm:$0xff]
        %v1776 = vld [vmem:[%s338 + $0x28] sm:$0xff]
        %v1777 = vld [vmem:[%s338 + $0x48] sm:$0xff]
        %v1778 = vld [vmem:[%s338 + $0x50] sm:$0xff]
        %v1779 = vld [vmem:[%s338 + $0x58] sm:$0xff]
        %v1780 = vadd.f32 %v1768, %v1774
        %v1781 = vadd.f32 %v1769, %v1775
        %v1782 = vadd.f32 %v1770, %v1776
        %v1783 = vadd.f32 %v1771, %v1777
        %v1784 = vadd.f32 %v1772, %v1778
        %v1785 = vadd.f32 %v1773, %v1779
        %1786 = vst [vmem:[%s381 + $0x18] sm:$0xff] %v1780
        %1787 = vst [vmem:[%s381 + $0x20] sm:$0xff] %v1781
        %1788 = vst [vmem:[%s381 + $0x28] sm:$0xff] %v1782
        %1789 = vst [vmem:[%s381 + $0x48] sm:$0xff] %v1783
        %1790 = vst [vmem:[%s381 + $0x50] sm:$0xff] %v1784
        %1791 = vst [vmem:[%s381 + $0x58] sm:$0xff] %v1785
        %s1792 = sand.u32 %s214, 1
        %s1793 = scalar_lea.sflag [#allocation4], %s1792
        %s1794 = sand.u32 %s214, 1
        %s1795 = smul.addr %s1794, 96
        %s1796 = scalar_lea.vmem [#allocation8], %s1795
        // Predicated region
        $region65: #{tpu_custom_call.1} parent=51 // pred_check
          %p1797 = pneg %p224
        $region66: #{tpu_custom_call.1} parent=51 // pred_check_branch
          %1799 = sbr.rel (%p1797) target = $region68
        $region67: #{tpu_custom_call.1} parent=51 // pred_region
          %1801 = vsyncadd %s1793, 0
          %s1802 = smul.addr %s28, 12
          %s1803 = smul.addr %s1802, 8
          %s1804 = scalar_lea.hbm %s8, %s1803
          %s1805 = sshll.u32 %s1796, 4
          %s1806 = int_to_ptr.vmem [resolvable:$true] %s1805
          %s1807 = sshll.u32 %s1804, 4
          %s1808 = int_to_ptr.hbm [resolvable:$true] %s1807
          %1813 = dma.vmem_to_hbm [thread:$0]  %s1806, 1536, %s1808, %s1793, 768, 768, 48
        $region68: #{tpu_custom_call.1} parent=51 // pred_fallthru
          _
      $region52: #{tpu_custom_call.1} parent=5 // pred_fallthru
        _
      %p1814 = scmp.le.s32.totalorder 2, %s23
      // Predicated region
      $region69: #{tpu_custom_call.1} parent=5 // pred_check
        %p1815 = pneg %p1814
      $region70: #{tpu_custom_call.1} parent=5 // pred_check_branch
        %1817 = sbr.rel (%p1815) target = $region72
      $region71: #{tpu_custom_call.1} parent=5 // pred_region
        %s1818 = ssub.s32 %s23, 2
        // Predicated region
        $region73: #{tpu_custom_call.1} parent=71 // pred_check
          %p1819 = pneg %p230
        $region74: #{tpu_custom_call.1} parent=71 // pred_check_branch
          %1821 = sbr.rel (%p1819) target = $region76
        $region75: #{tpu_custom_call.1} parent=71 // pred_region
          %s1822 = sand.u32 %s215, 1
          %s1823 = scalar_lea.sflag [#allocation4], %s1822
          %s1824 = sand.u32 %s215, 1
          %s1825 = smul.addr %s1824, 96
          %s1826 = scalar_lea.vmem [#allocation8], %s1825
          %1828 = dma.done %s1823, 1536
        $region76: #{tpu_custom_call.1} parent=71 // pred_fallthru
          _
      $region72: #{tpu_custom_call.1} parent=5 // pred_fallthru
        _
    $region6: #{tpu_custom_call.1} parent=1 // loop_footer
      %s27 = sadd.s32 1, %s23
    $region7: #{tpu_custom_call.1} parent=1 // loop_footer_branch
      %22 = sbr.rel target = $region3
    $region8: #{tpu_custom_call.1} parent=1 // loop_exit
      _
    %1829 = vsyncpa [#allocation3], 1
    %s1830 = scalar_lea.sflag [#allocation3], 1
    %1831 = vsyncpa %s1830, 1
    %1832 = vsyncpa [#allocation6], 1
    %s1833 = scalar_lea.sflag [#allocation6], 1
    %1834 = vsyncpa %s1833, 1
    %1835 = vsyncpa [#allocation4], 1
    %s1836 = scalar_lea.sflag [#allocation4], 1
    %1837 = vsyncpa %s1836, 1

</llo_original>
